<compile_context>
chip_gen: v7x
topology: tpu7x:2x2x1
jax: 0.10.0
libtpu: 0.0.40
codegen_flags: <defaults>
</compile_context>

<pallas_src>
import functools

import jax
import jax.numpy as jnp
from jax import lax
from jax.experimental import pallas as pl
from jax.experimental.pallas import tpu as pltpu

LAST_CHN = 256   # last_chn_dict['SleePyCo']
PROJ_DIM = 128
_NORM_EPS_SQ = 1e-24   # (F.normalize eps = 1e-12) ** 2


# ----------------------------- Pallas head kernel -----------------------------
def _head_kernel(feat_ref, w1_ref, b1_ref, w2_ref, b2_ref, out_ref, acc_ref,
                 *, rem, inv_l):
    # grid = (N_blocks, L_tiles); axis 0 "parallel" (per sample-block),
    # axis 1 "arbitrary" (temporal reduction, innermost).
    # feat_ref: (BN, C, TL) bf16 block of the NCL feature.
    lt = pl.program_id(1)
    n_lt = pl.num_programs(1)
    tl = feat_ref.shape[-1]

    @pl.when(lt == 0)
    def _():
        acc_ref[...] = jnp.zeros_like(acc_ref)

    if rem == tl:
        # All L tiles are full: unmasked fast path on every step.
        acc_ref[...] += jnp.sum(feat_ref[...], axis=-1, dtype=jnp.float32)
    else:
        # Steady-state tiles: unmasked sum (no iota/compare/select in hot loop).
        @pl.when(lt < n_lt - 1)
        def _():
            acc_ref[...] += jnp.sum(feat_ref[...], axis=-1, dtype=jnp.float32)

        # Final partial tile: mask the padded lanes (Pallas pads with
        # unspecified data) before folding into the f32 accumulator.
        @pl.when(lt == n_lt - 1)
        def _():
            f = feat_ref[...]
            lane = lax.broadcasted_iota(jnp.int32, f.shape, 2)
            f = jnp.where(lane < rem, f, jnp.zeros_like(f))
            acc_ref[...] += jnp.sum(f, axis=-1, dtype=jnp.float32)

    @pl.when(lt == n_lt - 1)
    def _():
        # AdaptiveAvgPool1d(1) + Flatten
        pooled = acc_ref[...] * inv_l                             # (BN, C) f32
        # Linear(256 -> 128) + ReLU
        h = jnp.dot(pooled, w1_ref[...],
                    preferred_element_type=jnp.float32) + b1_ref[...]
        h = jnp.maximum(h, 0.0)
        # Linear(128 -> 128)
        z = jnp.dot(h, w2_ref[...],
                    preferred_element_type=jnp.float32) + b2_ref[...]
        # F.normalize(dim=1, eps=1e-12): z * rsqrt(max(||z||^2, eps^2))
        sumsq = jnp.sum(z * z, axis=-1, keepdims=True)
        zn = z * lax.rsqrt(jnp.maximum(sumsq, _NORM_EPS_SQ))      # (BN, PROJ_DIM)
        out_ref[...] = zn.reshape(out_ref.shape)                  # (BN, 1, PROJ_DIM)


def head_pallas(feat_ncl, w1, b1, w2, b2, *, tl_cap=2048, bn_cap=8,
                feat_vmem_budget_bytes=12 * 1024 * 1024):
    """feat_ncl: (N, 256, L) feature in native NCL layout (bf16 or f32)."""
    N, C, L = feat_ncl.shape
    assert C == LAST_CHN

    # L tile: whole L when it fits (block == full dim is always legal),
    # otherwise a lane-aligned tile of up to tl_cap.
    if L <= tl_cap:
        tl = L
    else:
        tl = (tl_cap // 128) * 128
        assert tl >= 128
    n_lt = pl.cdiv(L, tl)
    rem = L - (n_lt - 1) * tl          # length of the final (possibly partial) tile

    # Sample batching: keep 2 * BN * C * tl * itemsize under the VMEM budget,
    # cap at bn_cap, and keep >= 2 N-blocks when N >= 2 (v7x megacore).
    itemsize = jnp.dtype(feat_ncl.dtype).itemsize
    bn = max(1, feat_vmem_budget_bytes // (2 * C * tl * itemsize))
    bn = min(int(bn), bn_cap, N)
    if N >= 2:
        bn = min(bn, -(-N // 2))
    bn = max(1, bn)
    n_nb = pl.cdiv(N, bn)

    kernel = functools.partial(_head_kernel, rem=rem, inv_l=1.0 / float(L))
    out = pl.pallas_call(
        kernel,
        out_shape=jax.ShapeDtypeStruct((N, 1, PROJ_DIM), jnp.float32),
        grid_spec=pltpu.PrefetchScalarGridSpec(
            num_scalar_prefetch=0,
            grid=(n_nb, n_lt),                  # reduction axis last
            in_specs=[
                pl.BlockSpec((bn, C, tl), lambda n, l: (n, 0, l)),
                pl.BlockSpec((C, PROJ_DIM), lambda n, l: (0, 0)),
                pl.BlockSpec((1, PROJ_DIM), lambda n, l: (0, 0)),
                pl.BlockSpec((PROJ_DIM, PROJ_DIM), lambda n, l: (0, 0)),
                pl.BlockSpec((1, PROJ_DIM), lambda n, l: (0, 0)),
            ],
            out_specs=pl.BlockSpec((bn, 1, PROJ_DIM), lambda n, l: (n, 0, 0)),
            scratch_shapes=[pltpu.VMEM((bn, C), jnp.float32)],
        ),
        compiler_params=pltpu.CompilerParams(
            dimension_semantics=("parallel", "arbitrary"),
            vmem_limit_bytes=32 * 1024 * 1024,
        ),
    )(feat_ncl, w1, b1, w2, b2)
    return out.reshape(N, PROJ_DIM)


# --------------------------- pure-JAX reference head ---------------------------
def head_reference(feat_ncl_f32, w1, b1, w2, b2):
    pooled = jnp.mean(feat_ncl_f32, axis=2)                       # (N, C)
    h = jnp.maximum(pooled @ w1 + b1, 0.0)
    z = h @ w2 + b2
    nrm = jnp.maximum(jnp.linalg.norm(z, axis=1, keepdims=True), 1e-12)
    return z / nrm


# ------------------------- stand-in backbone (glue JAX) ------------------------
def conv1d_relu(x, w, b, stride):
    # x: (N, C_in, L) NCL, w: (C_out, C_in, K)
    y = lax.conv_general_dilated(
        x, w, window_strides=(stride,), padding="SAME",
        dimension_numbers=("NCH", "OIH", "NCH"))
    return jax.nn.relu(y + b[None, :, None])


def backbone_forward(x, params):
    # TODO(synk): SleePyCoBackbone architecture not provided in model.py;
    #             stand-in Conv1d stack used for the feature extractor.
    h = conv1d_relu(x, params["w_c1"], params["b_c1"], stride=4)
    h = conv1d_relu(h, params["w_c2"], params["b_c2"], stride=4)
    h = conv1d_relu(h, params["w_c3"], params["b_c3"], stride=4)
    return [h]  # list of features, each (N, 256, L')


def init_params(key):
    ks = jax.random.split(key, 8)
    return {
        # stand-in backbone convs
        "w_c1": 0.1 * jax.random.normal(ks[0], (64, 1, 7), jnp.float32),
        "b_c1": jnp.zeros((64,), jnp.float32),
        "w_c2": 0.1 * jax.random.normal(ks[1], (128, 64, 5), jnp.float32),
        "b_c2": jnp.zeros((128,), jnp.float32),
        "w_c3": 0.1 * jax.random.normal(ks[2], (LAST_CHN, 128, 3), jnp.float32),
        "b_c3": jnp.zeros((LAST_CHN,), jnp.float32),
        # head linears, stored as (in, out)
        "w1": 0.05 * jax.random.normal(ks[3], (LAST_CHN, PROJ_DIM), jnp.float32),
        "b1": 0.01 * jax.random.normal(ks[4], (1, PROJ_DIM), jnp.float32),
        "w2": 0.05 * jax.random.normal(ks[5], (PROJ_DIM, PROJ_DIM), jnp.float32),
        "b2": 0.01 * jax.random.normal(ks[6], (1, PROJ_DIM), jnp.float32),
    }


@jax.jit
def main_model_forward(x, params):
    outputs = []
    features = backbone_forward(x, params)
    for feature in features:                       # (N, 256, L) NCL -- no transpose
        # bf16 cast is intended to fuse into the conv epilogue under jit ->
        # half the HBM bytes on the head's read path; kernel accumulates in f32.
        feat_bf16 = feature.astype(jnp.bfloat16)
        out = head_pallas(feat_bf16, params["w1"], params["b1"],
                          params["w2"], params["b2"])
        outputs.append(out)                        # (N, 128), L2-normalized rows
    return outputs


if __name__ == "__main__":
    key = jax.random.PRNGKey(0)
    k_x, k_p, k_f = jax.random.split(key, 3)
    params = init_params(k_p)

    # --- full-model demo (small shapes): (2, 1, 8192) -> feature (2, 256, 128) ---
    x = jax.random.normal(k_x, (2, 1, 8192), jnp.float32)
    outputs = main_model_forward(x, params)
    for o in outputs:
        jax.block_until_ready(o)
    norms = jnp.linalg.norm(outputs[0], axis=1)
    assert outputs[0].shape == (2, PROJ_DIM)
    assert bool(jnp.all(jnp.abs(norms - 1.0) < 1e-3))

    # --- kernel self-test: multi-tile L, partial last tile, partial N block ---
    feat = jax.random.normal(k_f, (3, LAST_CHN, 640), jnp.float32).astype(jnp.bfloat16)
    got = head_pallas(feat, params["w1"], params["b1"],
                      params["w2"], params["b2"], tl_cap=256)
    ref = head_reference(feat.astype(jnp.float32), params["w1"], params["b1"],
                         params["w2"], params["b2"])
    jax.block_until_ready(got)
    assert got.shape == (3, PROJ_DIM)
    assert bool(jnp.all(jnp.abs(got - ref) < 3e-3))

    print("KERNEL_OK")
</pallas_src>

<mosaic_0001>
module attributes {stable_mosaic.version = 11 : i64} {
  func.func @_head_kernel(%arg0: i32, %arg1: i32, %arg2: memref<1x256x128xbf16, #tpu.memory_space<vmem>>, %arg3: memref<256x128xf32, #tpu.memory_space<vmem>>, %arg4: memref<1x128xf32, #tpu.memory_space<vmem>>, %arg5: memref<128x128xf32, #tpu.memory_space<vmem>>, %arg6: memref<1x128xf32, #tpu.memory_space<vmem>>, %arg7: memref<1x1x128xf32, #tpu.memory_space<vmem>>, %arg8: memref<1x256xf32, #tpu.memory_space<vmem>>) attributes {dimension_semantics = [#tpu.dimension_semantics<parallel>, #tpu.dimension_semantics<arbitrary>], iteration_bounds = array<i64: 2, 1>, scalar_prefetch = 0 : i64, scratch_operands = 1 : i64, tpu.core_type = #tpu.core_type<tc>, window_params = [{transform_indices = @transform_0, window_bounds = array<i64: 1, 256, 128>}, {pipeline_mode = #tpu.pipeline_mode<synchronous>, transform_indices = @transform_1, window_bounds = array<i64: 256, 128>}, {pipeline_mode = #tpu.pipeline_mode<synchronous>, transform_indices = @transform_2, window_bounds = array<i64: 1, 128>}, {pipeline_mode = #tpu.pipeline_mode<synchronous>, transform_indices = @transform_3, window_bounds = array<i64: 128, 128>}, {pipeline_mode = #tpu.pipeline_mode<synchronous>, transform_indices = @transform_4, window_bounds = array<i64: 1, 128>}, {transform_indices = @transform_5, window_bounds = array<i64: 1, 1, 128>}]} {
    %c0_i32 = arith.constant 0 : i32
    %0 = arith.cmpi eq, %arg1, %c0_i32 : i32
    %1 = arith.extui %0 : i1 to i32
    %c0_i32_0 = arith.constant 0 : i32
    %2 = arith.cmpi ne, %1, %c0_i32_0 : i32
    scf.if %2 {
      %cst_9 = arith.constant 0.000000e+00 : f32
      %12 = vector.broadcast %cst_9 : f32 to vector<1x256xf32>
      %c0_10 = arith.constant 0 : index
      %c0_11 = arith.constant 0 : index
      %13 = vector.load %arg8[%c0_10, %c0_11] : memref<1x256xf32, #tpu.memory_space<vmem>>, vector<1x256xf32>
      tpu.vector_store %arg8[%c0_10, %c0_11], %12 {strides = array<i32>} : memref<1x256xf32, #tpu.memory_space<vmem>>, vector<1x256xf32>,
    } else {
    }
    %c0 = arith.constant 0 : index
    %c0_1 = arith.constant 0 : index
    %3 = vector.load %arg8[%c0, %c0_1] : memref<1x256xf32, #tpu.memory_space<vmem>>, vector<1x256xf32>
    %c0_2 = arith.constant 0 : index
    %c0_3 = arith.constant 0 : index
    %c0_4 = arith.constant 0 : index
    %4 = vector.load %arg2[%c0_2, %c0_3, %c0_4] : memref<1x256x128xbf16, #tpu.memory_space<vmem>>, vector<1x256x128xbf16>
    %5 = arith.extf %4 : vector<1x256x128xbf16> to vector<1x256x128xf32>
    %cst = arith.constant dense<0.000000e+00> : vector<1x256xf32>
    %6 = vector.multi_reduction <add>, %5, %cst [2] : vector<1x256x128xf32> to vector<1x256xf32>
    %7 = arith.addf %3, %6 : vector<1x256xf32>
    %c0_5 = arith.constant 0 : index
    %c0_6 = arith.constant 0 : index
    %8 = vector.load %arg8[%c0_5, %c0_6] : memref<1x256xf32, #tpu.memory_space<vmem>>, vector<1x256xf32>
    tpu.vector_store %arg8[%c0_5, %c0_6], %7 {strides = array<i32>} : memref<1x256xf32, #tpu.memory_space<vmem>>, vector<1x256xf32>,
    %c0_i32_7 = arith.constant 0 : i32
    %9 = arith.cmpi eq, %arg1, %c0_i32_7 : i32
    %10 = arith.extui %9 : i1 to i32
    %c0_i32_8 = arith.constant 0 : i32
    %11 = arith.cmpi ne, %10, %c0_i32_8 : i32
    scf.if %11 {
      %c0_9 = arith.constant 0 : index
      %c0_10 = arith.constant 0 : index
      %12 = vector.load %arg8[%c0_9, %c0_10] : memref<1x256xf32, #tpu.memory_space<vmem>>, vector<1x256xf32>
      %cst_11 = arith.constant 7.812500e-03 : f32
      %13 = vector.broadcast %cst_11 : f32 to vector<1x256xf32>
      %14 = arith.mulf %12, %13 : vector<1x256xf32>
      %c0_12 = arith.constant 0 : index
      %c0_13 = arith.constant 0 : index
      %15 = vector.load %arg3[%c0_12, %c0_13] : memref<256x128xf32, #tpu.memory_space<vmem>>, vector<256x128xf32>
      %cst_14 = arith.constant dense<0.000000e+00> : vector<1x128xf32>
      %16 = tpu.matmul %14, %15, %cst_14 {dimension_numbers = #tpu.dot_dimension_numbers<[1], [0], [0], [1], [0, 0, 1, 1], [], []>} : vector<1x256xf32>, vector<256x128xf32>, vector<1x128xf32> -> vector<1x128xf32>
      %c0_15 = arith.constant 0 : index
      %c0_16 = arith.constant 0 : index
      %17 = vector.load %arg4[%c0_15, %c0_16] : memref<1x128xf32, #tpu.memory_space<vmem>>, vector<1x128xf32>
      %18 = arith.addf %16, %17 : vector<1x128xf32>
      %cst_17 = arith.constant 0.000000e+00 : f32
      %19 = vector.broadcast %cst_17 : f32 to vector<1x128xf32>
      %20 = arith.maximumf %18, %19 : vector<1x128xf32>
      %c0_18 = arith.constant 0 : index
      %c0_19 = arith.constant 0 : index
      %21 = vector.load %arg5[%c0_18, %c0_19] : memref<128x128xf32, #tpu.memory_space<vmem>>, vector<128x128xf32>
      %cst_20 = arith.constant dense<0.000000e+00> : vector<1x128xf32>
      %22 = tpu.matmul %20, %21, %cst_20 {dimension_numbers = #tpu.dot_dimension_numbers<[1], [0], [0], [1], [0, 0, 1, 1], [], []>} : vector<1x128xf32>, vector<128x128xf32>, vector<1x128xf32> -> vector<1x128xf32>
      %c0_21 = arith.constant 0 : index
      %c0_22 = arith.constant 0 : index
      %23 = vector.load %arg6[%c0_21, %c0_22] : memref<1x128xf32, #tpu.memory_space<vmem>>, vector<1x128xf32>
      %24 = arith.addf %22, %23 : vector<1x128xf32>
      %25 = arith.mulf %24, %24 : vector<1x128xf32>
      %cst_23 = arith.constant dense<0.000000e+00> : vector<1xf32>
      %26 = vector.multi_reduction <add>, %25, %cst_23 [1] : vector<1x128xf32> to vector<1xf32>
      %27 = vector.shape_cast %26 : vector<1xf32> to vector<1x1xf32>
      %cst_24 = arith.constant 1.000000e-24 : f32
      %28 = vector.broadcast %cst_24 : f32 to vector<1x1xf32>
      %29 = arith.maximumf %27, %28 : vector<1x1xf32>
      %30 = math.rsqrt %29 : vector<1x1xf32>
      %31 = vector.broadcast %30 : vector<1x1xf32> to vector<1x128xf32>
      %32 = arith.mulf %24, %31 : vector<1x128xf32>
      %33 = vector.shape_cast %32 : vector<1x128xf32> to vector<1x1x128xf32>
      %c0_25 = arith.constant 0 : index
      %c0_26 = arith.constant 0 : index
      %c0_27 = arith.constant 0 : index
      %34 = vector.load %arg7[%c0_25, %c0_26, %c0_27] : memref<1x1x128xf32, #tpu.memory_space<vmem>>, vector<1x1x128xf32>
      tpu.vector_store %arg7[%c0_25, %c0_26, %c0_27], %33 {strides = array<i32>} : memref<1x1x128xf32, #tpu.memory_space<vmem>>, vector<1x1x128xf32>,
    } else {
    }
    return
  }
  func.func @transform_0(%arg0: i32, %arg1: i32) -> (i32, i32, i32) {
    %c0_i32 = arith.constant 0 : i32
    %c0_i32_0 = arith.constant 0 : i32
    return %arg0, %c0_i32, %arg1 : i32, i32, i32
  }
  func.func @transform_1(%arg0: i32, %arg1: i32) -> (i32, i32) {
    %c0_i32 = arith.constant 0 : i32
    %c0_i32_0 = arith.constant 0 : i32
    %c0_i32_1 = arith.constant 0 : i32
    return %c0_i32, %c0_i32_0 : i32, i32
  }
  func.func @transform_2(%arg0: i32, %arg1: i32) -> (i32, i32) {
    %c0_i32 = arith.constant 0 : i32
    %c0_i32_0 = arith.constant 0 : i32
    %c0_i32_1 = arith.constant 0 : i32
    return %c0_i32, %c0_i32_0 : i32, i32
  }
  func.func @transform_3(%arg0: i32, %arg1: i32) -> (i32, i32) {
    %c0_i32 = arith.constant 0 : i32
    %c0_i32_0 = arith.constant 0 : i32
    %c0_i32_1 = arith.constant 0 : i32
    return %c0_i32, %c0_i32_0 : i32, i32
  }
  func.func @transform_4(%arg0: i32, %arg1: i32) -> (i32, i32) {
    %c0_i32 = arith.constant 0 : i32
    %c0_i32_0 = arith.constant 0 : i32
    %c0_i32_1 = arith.constant 0 : i32
    return %c0_i32, %c0_i32_0 : i32, i32
  }
  func.func @transform_5(%arg0: i32, %arg1: i32) -> (i32, i32, i32) {
    %c0_i32 = arith.constant 0 : i32
    %c0_i32_0 = arith.constant 0 : i32
    %c0_i32_1 = arith.constant 0 : i32
    return %arg0, %c0_i32, %c0_i32_0 : i32, i32, i32
  }
}

</mosaic_0001>

<llo_original>
// kernel: main_model_forward.1
$region0: #{main_model_forward.1}
  #allocation0 [shape = 'u32[]', space=smem, size = 0x4, offset = 0x4, fixed_abs, tag = 'smem constant byte address 0x4 - core index']
  #allocation1 [shape = 'u32[144,128]{1,0:T(1,128)}', space=vmem, size = 0x12000, scoped, tag = 'internal scratch']
  #allocation2 [shape = 'f32[1,256]{1,0:T(1,128)}', space=vmem, size = 0x400, scoped, tag = 'scratch operand']
  %s0 = inlined_call_operand.vmem [shape: bf16[2,256,128], index: 0, kind: input, shape index: {}]
  %s1 = inlined_call_operand.vmem [shape: f32[256,128], index: 1, kind: input, shape index: {}]
  %s2 = inlined_call_operand.vmem [shape: f32[1,128], index: 2, kind: input, shape index: {}]
  %s3 = inlined_call_operand.vmem [shape: f32[128,128], index: 3, kind: input, shape index: {}]
  %s4 = inlined_call_operand.vmem [shape: f32[1,128], index: 4, kind: input, shape index: {}]
  %s5 = inlined_call_operand.hbm [shape: f32[2,1,128], index: 5, kind: output, shape index: {}]
  %s6 = sld [smem:[#allocation0]]
  $region61: #{main_model_forward.1} parent=0
    _
  %s8 = ssub.s32 1, %s6
  %s9 = scalar_select 0, %s8, %s6
  $region1: #{main_model_forward.1} parent=0
    #allocation3 [shape = 'u8[1024]{0}', space=vmem, size = 0x400, scoped, tag = 'output window, operand 0']
    #allocation4 [shape = 's32[2]{0}', space=sflag, size = 0x8, scoped, tag = 'scoped memory for main_model_forward.1']
    %10 = vsyncpa [#allocation4], 0
    %s11 = scalar_lea.sflag [#allocation4], 1
    %12 = vsyncpa %s11, 0
    loop: start=0, step=1, limit=4
    $region2: #{main_model_forward.1} parent=1 // loop_pre_header
      _
    $region3: #{main_model_forward.1} parent=1 // loop_header
      %s14 = sphi 0, %s18
      %p15 = scmp.ge.s32.totalorder %s14, 4
      %s21 = sphi 0, %s33
      %s22 = sphi 0, %s29
      %s23 = sphi 0, %s21
      %s24 = sphi 0, %s22
      %s25 = sphi 0, %s23
      %s26 = sphi 0, %s24
      %s38 = sphi 0, %s40
      %s41 = sphi 0, %s38
      %s42 = sphi 0, %s41
      %s58 = sphi 0, %s42
      %s62 = sphi 0, %s62
      %s64 = sphi 0, %s62
      %s65 = sphi 0, %s64
      %s79 = sphi 0, %s65
      %s83 = sphi 0, %s83
      %s85 = sphi 0, %s83
      %s86 = sphi 0, %s85
      %s100 = sphi 0, %s86
      %s104 = sphi 0, %s104
      %s106 = sphi 0, %s104
      %s107 = sphi 0, %s106
      %s121 = sphi 0, %s107
      %s125 = sphi 0, %s125
      %s127 = sphi 0, %s125
      %s128 = sphi 0, %s127
      %s142 = sphi 0, %s128
      %s148 = sphi 0, %s150
      %s151 = sphi 0, %s148
      %s152 = sphi 0, %s151
      %s168 = sphi 0, %s152
    $region4: #{main_model_forward.1} parent=1 // loop_header_branch
      %17 = sbr.rel (%p15) target = $region8
    $region5: #{main_model_forward.1} parent=1 // loop_body
      %s19 = ssub.s32 %s14, 1
      %s20 = ssub.s32 %s14, 2
      %s27 = sadd.s32 1, %s22
      %p28 = scmp.ge.s32.totalorder %s27, 1
      %s29 = scalar_select %p28, 0, %s27
      %s30 = sadd.s32 1, %s21
      %s31 = scalar_select %p28, %s30, %s21
      %p32 = scmp.ge.s32.totalorder %s31, 2
      %s33 = scalar_select %p32, 0, %s31
      %s34 = ssub.s32 %s21, %s33
      %s35 = ssub.s32 %s22, %s29
      %s36 = sor.u32 %s34, %s35
      %p37 = scmp.eq.s32.totalorder %s36, 0
      %s39 = sadd.s32 %s38, 1
      %s40 = scalar_select %p37, %s38, %s39
      %p43 = pneg %p37
      %p44 = scmp.eq.s32.totalorder %s14, 1
      %p45 = por %p43, %p44
      %p46 = scmp.ne.s32.totalorder %s38, %s41
      %p47 = scmp.eq.s32.totalorder %s14, 0
      %p48 = por %p46, %p47
      %p49 = scmp.ne.s32.totalorder %s38, %s41
      %p50 = scmp.eq.s32.totalorder %s19, 1
      %p51 = por %p49, %p50
      %p52 = scmp.ne.s32.totalorder %s41, %s42
      %p53 = scmp.eq.s32.totalorder %s19, 0
      %p54 = por %p52, %p53
      %p55 = scmp.ne.s32.totalorder %s41, %s42
      %p56 = scmp.eq.s32.totalorder %s20, 1
      %p57 = por %p55, %p56
      %p59 = scmp.ne.s32.totalorder %s42, %s58
      %p60 = scmp.eq.s32.totalorder %s20, 0
      %p61 = por %p59, %p60
      %s63 = sadd.s32 %s62, 1
      %p66 = scmp.eq.s32.totalorder %s14, 1
      %p67 = scmp.ne.s32.totalorder %s62, %s64
      %p68 = scmp.eq.s32.totalorder %s14, 0
      %p69 = por %p67, %p68
      %p70 = scmp.ne.s32.totalorder %s62, %s64
      %p71 = scmp.eq.s32.totalorder %s19, 1
      %p72 = por %p70, %p71
      %p73 = scmp.ne.s32.totalorder %s64, %s65
      %p74 = scmp.eq.s32.totalorder %s19, 0
      %p75 = por %p73, %p74
      %p76 = scmp.ne.s32.totalorder %s64, %s65
      %p77 = scmp.eq.s32.totalorder %s20, 1
      %p78 = por %p76, %p77
      %p80 = scmp.ne.s32.totalorder %s65, %s79
      %p81 = scmp.eq.s32.totalorder %s20, 0
      %p82 = por %p80, %p81
      %s84 = sadd.s32 %s83, 1
      %p87 = scmp.eq.s32.totalorder %s14, 1
      %p88 = scmp.ne.s32.totalorder %s83, %s85
      %p89 = scmp.eq.s32.totalorder %s14, 0
      %p90 = por %p88, %p89
      %p91 = scmp.ne.s32.totalorder %s83, %s85
      %p92 = scmp.eq.s32.totalorder %s19, 1
      %p93 = por %p91, %p92
      %p94 = scmp.ne.s32.totalorder %s85, %s86
      %p95 = scmp.eq.s32.totalorder %s19, 0
      %p96 = por %p94, %p95
      %p97 = scmp.ne.s32.totalorder %s85, %s86
      %p98 = scmp.eq.s32.totalorder %s20, 1
      %p99 = por %p97, %p98
      %p101 = scmp.ne.s32.totalorder %s86, %s100
      %p102 = scmp.eq.s32.totalorder %s20, 0
      %p103 = por %p101, %p102
      %s105 = sadd.s32 %s104, 1
      %p108 = scmp.eq.s32.totalorder %s14, 1
      %p109 = scmp.ne.s32.totalorder %s104, %s106
      %p110 = scmp.eq.s32.totalorder %s14, 0
      %p111 = por %p109, %p110
      %p112 = scmp.ne.s32.totalorder %s104, %s106
      %p113 = scmp.eq.s32.totalorder %s19, 1
      %p114 = por %p112, %p113
      %p115 = scmp.ne.s32.totalorder %s106, %s107
      %p116 = scmp.eq.s32.totalorder %s19, 0
      %p117 = por %p115, %p116
      %p118 = scmp.ne.s32.totalorder %s106, %s107
      %p119 = scmp.eq.s32.totalorder %s20, 1
      %p120 = por %p118, %p119
      %p122 = scmp.ne.s32.totalorder %s107, %s121
      %p123 = scmp.eq.s32.totalorder %s20, 0
      %p124 = por %p122, %p123
      %s126 = sadd.s32 %s125, 1
      %p129 = scmp.eq.s32.totalorder %s14, 1
      %p130 = scmp.ne.s32.totalorder %s125, %s127
      %p131 = scmp.eq.s32.totalorder %s14, 0
      %p132 = por %p130, %p131
      %p133 = scmp.ne.s32.totalorder %s125, %s127
      %p134 = scmp.eq.s32.totalorder %s19, 1
      %p135 = por %p133, %p134
      %p136 = scmp.ne.s32.totalorder %s127, %s128
      %p137 = scmp.eq.s32.totalorder %s19, 0
      %p138 = por %p136, %p137
      %p139 = scmp.ne.s32.totalorder %s127, %s128
      %p140 = scmp.eq.s32.totalorder %s20, 1
      %p141 = por %p139, %p140
      %p143 = scmp.ne.s32.totalorder %s128, %s142
      %p144 = scmp.eq.s32.totalorder %s20, 0
      %p145 = por %p143, %p144
      %s146 = ssub.s32 %s21, %s33
      %p147 = scmp.eq.s32.totalorder %s146, 0
      %s149 = sadd.s32 %s148, 1
      %s150 = scalar_select %p147, %s148, %s149
      %p153 = pneg %p147
      %p154 = scmp.eq.s32.totalorder %s14, 1
      %p155 = por %p153, %p154
      %p156 = scmp.ne.s32.totalorder %s148, %s151
      %p157 = scmp.eq.s32.totalorder %s14, 0
      %p158 = por %p156, %p157
      %p159 = scmp.ne.s32.totalorder %s148, %s151
      %p160 = scmp.eq.s32.totalorder %s19, 1
      %p161 = por %p159, %p160
      %p162 = scmp.ne.s32.totalorder %s151, %s152
      %p163 = scmp.eq.s32.totalorder %s19, 0
      %p164 = por %p162, %p163
      %p165 = scmp.ne.s32.totalorder %s151, %s152
      %p166 = scmp.eq.s32.totalorder %s20, 1
      %p167 = por %p165, %p166
      %p169 = scmp.ne.s32.totalorder %s152, %s168
      %p170 = scmp.eq.s32.totalorder %s20, 0
      %p171 = por %p169, %p170
      %p172 = scmp.le.s32.totalorder 1, %s14
      %p173 = scmp.lt.s32.totalorder %s14, 3
      %p174 = pnand %p172, %p173
      %p175 = pneg %p174
      // Predicated region
      $region9: #{main_model_forward.1} parent=5 // pred_check
        _
      $region10: #{main_model_forward.1} parent=5 // pred_check_branch
        %177 = sbr.rel (%p174) target = $region12
      $region11: #{main_model_forward.1} parent=5 // pred_region
        %s178 = ssub.s32 %s14, 1
        // Predicated region
        $region13: #{main_model_forward.1} parent=11 // pred_check
          %p179 = pneg %p75
        $region14: #{main_model_forward.1} parent=11 // pred_check_branch
          %181 = sbr.rel (%p179) target = $region16
        $region15: #{main_model_forward.1} parent=11 // pred_region
          _
        $region16: #{main_model_forward.1} parent=11 // pred_fallthru
          _
        // Predicated region
        $region17: #{main_model_forward.1} parent=11 // pred_check
          %p182 = pneg %p96
        $region18: #{main_model_forward.1} parent=11 // pred_check_branch
          %184 = sbr.rel (%p182) target = $region20
        $region19: #{main_model_forward.1} parent=11 // pred_region
          _
        $region20: #{main_model_forward.1} parent=11 // pred_fallthru
          _
        // Predicated region
        $region21: #{main_model_forward.1} parent=11 // pred_check
          %p185 = pneg %p117
        $region22: #{main_model_forward.1} parent=11 // pred_check_branch
          %187 = sbr.rel (%p185) target = $region24
        $region23: #{main_model_forward.1} parent=11 // pred_region
          _
        $region24: #{main_model_forward.1} parent=11 // pred_fallthru
          _
        // Predicated region
        $region25: #{main_model_forward.1} parent=11 // pred_check
          %p188 = pneg %p138
        $region26: #{main_model_forward.1} parent=11 // pred_check_branch
          %190 = sbr.rel (%p188) target = $region28
        $region27: #{main_model_forward.1} parent=11 // pred_region
          _
        $region28: #{main_model_forward.1} parent=11 // pred_fallthru
          _
      $region12: #{main_model_forward.1} parent=5 // pred_fallthru
        _
      %p191 = scmp.lt.s32.totalorder %s14, 2
      // Predicated region
      $region29: #{main_model_forward.1} parent=5 // pred_check
        %p192 = pneg %p191
      $region30: #{main_model_forward.1} parent=5 // pred_check_branch
        %194 = sbr.rel (%p192) target = $region32
      $region31: #{main_model_forward.1} parent=5 // pred_region
        // Predicated region
        $region33: #{main_model_forward.1} parent=31 // pred_check
          %p195 = pneg %p48
        $region34: #{main_model_forward.1} parent=31 // pred_check_branch
          %197 = sbr.rel (%p195) target = $region36
        $region35: #{main_model_forward.1} parent=31 // pred_region
          %p198 = scmp.lt.s32.totalorder %s21, 1
          %s199 = scalar_select %p198, %s21, 1
          %p200 = scmp.lt.s32.totalorder %s22, 0
          %s201 = scalar_select %p200, %s22, 0
          %s202 = smul.addr %s199, 32
          %s203 = sadd.s32 %s201, %s202
          %s204 = smul.addr %s203, 4
          %s205 = scalar_lea.vmem %s0, %s204
        $region36: #{main_model_forward.1} parent=31 // pred_fallthru
          _
      $region32: #{main_model_forward.1} parent=5 // pred_fallthru
        _
      %p206 = scmp.le.s32.totalorder 1, %s14
      %p207 = scmp.lt.s32.totalorder %s14, 3
      %p208 = pnand %p206, %p207
      %p209 = pneg %p208
      // Predicated region
      $region37: #{main_model_forward.1} parent=5 // pred_check
        _
      $region38: #{main_model_forward.1} parent=5 // pred_check_branch
        %211 = sbr.rel (%p208) target = $region40
      $region39: #{main_model_forward.1} parent=5 // pred_region
        %s212 = ssub.s32 %s14, 1
        %p213 = scmp.lt.s32.totalorder %s23, 1
        %s214 = scalar_select %p213, %s23, 1
        %p215 = scmp.lt.s32.totalorder %s24, 0
        %s216 = scalar_select %p215, %s24, 0
        %s217 = smul.addr %s214, 32
        %s218 = sadd.s32 %s216, %s217
        %s219 = smul.addr %s218, 4
        %s220 = scalar_lea.vmem %s0, %s219
        %p221 = pneg %p54
        %p222 = pneg %p51
        %p223 = pneg %p75
        %p224 = pneg %p72
        %p225 = pneg %p96
        %p226 = pneg %p93
        %p227 = pneg %p117
        %p228 = pneg %p114
        %p229 = pneg %p138
        %p230 = pneg %p135
        %p231 = pneg %p164
        %p232 = pneg %p161
        %s233 = sand.u32 %s151, 1
        %s234 = scalar_lea.sflag [#allocation4], %s233
        %s235 = sand.u32 %s151, 1
        %s236 = scalar_lea.vmem [#allocation3], %s235
        %p237 = scmp.lt.s32.totalorder %s23, 1
        %s238 = scalar_select %p237, %s23, 1
        %p239 = scmp.lt.s32.totalorder %s24, 0
        %s240 = scalar_select %p239, %s24, 0
        %s241 = smul.addr %s238, 32
        %s242 = sadd.s32 %s240, %s241
        %s243 = smul.addr %s242, 4
        %s244 = scalar_lea.vmem %s0, %s243
        %p245 = scmp.eq.s32.totalorder %s24, 0
        // Predicated region
        $region41: #{main_model_forward.1} parent=39 // pred_check
          %p246 = pneg %p245
        $region42: #{main_model_forward.1} parent=39 // pred_check_branch
          %248 = sbr.rel (%p246) target = $region44
        $region43: #{main_model_forward.1} parent=39 // pred_region
          %v249 = vlaneseq
          %vm250 = vcmp.ge.s32.totalorder %v249, 0
          %vm251 = vcmp.lt.s32.totalorder %v249, 256
          %vm252 = vmand %vm250, %vm251
          %253 = vst.msk [vmem:[#allocation2] sm:$0x3] %vm252, 0.0
        $region44: #{main_model_forward.1} parent=39 // pred_fallthru
          _
        %v254 = vld [vmem:[#allocation2] sm:$0x3]
        %v255 = vld [vmem:[%s244] sm:$0xf]
        %v256 = vld [vmem:[%s244 + $0x4] sm:$0xf]
        %v257 = vld [vmem:[%s244 + $0x8] sm:$0xf]
        %v258 = vld [vmem:[%s244 + $0xc] sm:$0xf]
        %v259 = vld [vmem:[%s244 + $0x10] sm:$0xf]
        %v260 = vld [vmem:[%s244 + $0x14] sm:$0xf]
        %v261 = vld [vmem:[%s244 + $0x18] sm:$0xf]
        %v262 = vld [vmem:[%s244 + $0x1c] sm:$0xf]
        %v263 = vld [vmem:[%s244 + $0x20] sm:$0xf]
        %v264 = vld [vmem:[%s244 + $0x24] sm:$0xf]
        %v265 = vld [vmem:[%s244 + $0x28] sm:$0xf]
        %v266 = vld [vmem:[%s244 + $0x2c] sm:$0xf]
        %v267 = vld [vmem:[%s244 + $0x30] sm:$0xf]
        %v268 = vld [vmem:[%s244 + $0x34] sm:$0xf]
        %v269 = vld [vmem:[%s244 + $0x38] sm:$0xf]
        %v270 = vld [vmem:[%s244 + $0x3c] sm:$0xf]
        %v271 = vld [vmem:[%s244 + $0x40] sm:$0xf]
        %v272 = vld [vmem:[%s244 + $0x44] sm:$0xf]
        %v273 = vld [vmem:[%s244 + $0x48] sm:$0xf]
        %v274 = vld [vmem:[%s244 + $0x4c] sm:$0xf]
        %v275 = vld [vmem:[%s244 + $0x50] sm:$0xf]
        %v276 = vld [vmem:[%s244 + $0x54] sm:$0xf]
        %v277 = vld [vmem:[%s244 + $0x58] sm:$0xf]
        %v278 = vld [vmem:[%s244 + $0x5c] sm:$0xf]
        %v279 = vld [vmem:[%s244 + $0x60] sm:$0xf]
        %v280 = vld [vmem:[%s244 + $0x64] sm:$0xf]
        %v281 = vld [vmem:[%s244 + $0x68] sm:$0xf]
        %v282 = vld [vmem:[%s244 + $0x6c] sm:$0xf]
        %v283 = vld [vmem:[%s244 + $0x70] sm:$0xf]
        %v284 = vld [vmem:[%s244 + $0x74] sm:$0xf]
        %v285 = vld [vmem:[%s244 + $0x78] sm:$0xf]
        %v286 = vld [vmem:[%s244 + $0x7c] sm:$0xf]
        %v287 = vunpack.c.l.bf16 %v255
        %v288 = vunpack.c.l.bf16 %v256
        %v289 = vunpack.c.l.bf16 %v257
        %v290 = vunpack.c.l.bf16 %v258
        %v291 = vunpack.c.l.bf16 %v259
        %v292 = vunpack.c.l.bf16 %v260
        %v293 = vunpack.c.l.bf16 %v261
        %v294 = vunpack.c.l.bf16 %v262
        %v295 = vunpack.c.l.bf16 %v263
        %v296 = vunpack.c.l.bf16 %v264
        %v297 = vunpack.c.l.bf16 %v265
        %v298 = vunpack.c.l.bf16 %v266
        %v299 = vunpack.c.l.bf16 %v267
        %v300 = vunpack.c.l.bf16 %v268
        %v301 = vunpack.c.l.bf16 %v269
        %v302 = vunpack.c.l.bf16 %v270
        %v303 = vunpack.c.l.bf16 %v271
        %v304 = vunpack.c.l.bf16 %v272
        %v305 = vunpack.c.l.bf16 %v273
        %v306 = vunpack.c.l.bf16 %v274
        %v307 = vunpack.c.l.bf16 %v275
        %v308 = vunpack.c.l.bf16 %v276
        %v309 = vunpack.c.l.bf16 %v277
        %v310 = vunpack.c.l.bf16 %v278
        %v311 = vunpack.c.l.bf16 %v279
        %v312 = vunpack.c.l.bf16 %v280
        %v313 = vunpack.c.l.bf16 %v281
        %v314 = vunpack.c.l.bf16 %v282
        %v315 = vunpack.c.l.bf16 %v283
        %v316 = vunpack.c.l.bf16 %v284
        %v317 = vunpack.c.l.bf16 %v285
        %v318 = vunpack.c.l.bf16 %v286
        %319 = vadd.xlane.f32.xlu0 %v287
        %v320 = vpop.xlane.xlu0 %319
        %321 = vadd.xlane.f32.xlu0 %v288
        %v322 = vpop.xlane.xlu0 %321
        %323 = vadd.xlane.f32.xlu0 %v289
        %v324 = vpop.xlane.xlu0 %323
        %325 = vadd.xlane.f32.xlu0 %v290
        %v326 = vpop.xlane.xlu0 %325
        %327 = vadd.xlane.f32.xlu0 %v291
        %v328 = vpop.xlane.xlu0 %327
        %329 = vadd.xlane.f32.xlu0 %v292
        %v330 = vpop.xlane.xlu0 %329
        %331 = vadd.xlane.f32.xlu0 %v293
        %v332 = vpop.xlane.xlu0 %331
        %333 = vadd.xlane.f32.xlu0 %v294
        %v334 = vpop.xlane.xlu0 %333
        %335 = vadd.xlane.f32.xlu0 %v295
        %v336 = vpop.xlane.xlu0 %335
        %337 = vadd.xlane.f32.xlu0 %v296
        %v338 = vpop.xlane.xlu0 %337
        %339 = vadd.xlane.f32.xlu0 %v297
        %v340 = vpop.xlane.xlu0 %339
        %341 = vadd.xlane.f32.xlu0 %v298
        %v342 = vpop.xlane.xlu0 %341
        %343 = vadd.xlane.f32.xlu0 %v299
        %v344 = vpop.xlane.xlu0 %343
        %345 = vadd.xlane.f32.xlu0 %v300
        %v346 = vpop.xlane.xlu0 %345
        %347 = vadd.xlane.f32.xlu0 %v301
        %v348 = vpop.xlane.xlu0 %347
        %349 = vadd.xlane.f32.xlu0 %v302
        %v350 = vpop.xlane.xlu0 %349
        %351 = vadd.xlane.f32.xlu0 %v303
        %v352 = vpop.xlane.xlu0 %351
        %353 = vadd.xlane.f32.xlu0 %v304
        %v354 = vpop.xlane.xlu0 %353
        %355 = vadd.xlane.f32.xlu0 %v305
        %v356 = vpop.xlane.xlu0 %355
        %357 = vadd.xlane.f32.xlu0 %v306
        %v358 = vpop.xlane.xlu0 %357
        %359 = vadd.xlane.f32.xlu0 %v307
        %v360 = vpop.xlane.xlu0 %359
        %361 = vadd.xlane.f32.xlu0 %v308
        %v362 = vpop.xlane.xlu0 %361
        %363 = vadd.xlane.f32.xlu0 %v309
        %v364 = vpop.xlane.xlu0 %363
        %365 = vadd.xlane.f32.xlu0 %v310
        %v366 = vpop.xlane.xlu0 %365
        %367 = vadd.xlane.f32.xlu0 %v311
        %v368 = vpop.xlane.xlu0 %367
        %369 = vadd.xlane.f32.xlu0 %v312
        %v370 = vpop.xlane.xlu0 %369
        %371 = vadd.xlane.f32.xlu0 %v313
        %v372 = vpop.xlane.xlu0 %371
        %373 = vadd.xlane.f32.xlu0 %v314
        %v374 = vpop.xlane.xlu0 %373
        %375 = vadd.xlane.f32.xlu0 %v315
        %v376 = vpop.xlane.xlu0 %375
        %377 = vadd.xlane.f32.xlu0 %v316
        %v378 = vpop.xlane.xlu0 %377
        %379 = vadd.xlane.f32.xlu0 %v317
        %v380 = vpop.xlane.xlu0 %379
        %381 = vadd.xlane.f32.xlu0 %v318
        %v382 = vpop.xlane.xlu0 %381
        %v415 = vlaneseq
        %v416 = vshrl.u32 %v415, 7
        %v417 = vsub.s32 0, %v416
        %v418 = vrot.slane %v320, %v417
        %v419 = vlaneseq
        %v420 = vshrl.u32 %v419, 7
        %v421 = vsub.s32 1, %v420
        %v422 = vrot.slane %v320, %v421
        %v423 = vlaneseq
        %v424 = vshrl.u32 %v423, 7
        %v425 = vsub.s32 2, %v424
        %v426 = vrot.slane %v320, %v425
        %v427 = vlaneseq
        %v428 = vshrl.u32 %v427, 7
        %v429 = vsub.s32 3, %v428
        %v430 = vrot.slane %v320, %v429
        %v431 = vlaneseq
        %v432 = vshrl.u32 %v431, 7
        %v433 = vsub.s32 4, %v432
        %v434 = vrot.slane %v320, %v433
        %v435 = vlaneseq
        %v436 = vshrl.u32 %v435, 7
        %v437 = vsub.s32 5, %v436
        %v438 = vrot.slane %v320, %v437
        %v439 = vlaneseq
        %v440 = vshrl.u32 %v439, 7
        %v441 = vsub.s32 6, %v440
        %v442 = vrot.slane %v320, %v441
        %v443 = vlaneseq
        %v444 = vshrl.u32 %v443, 7
        %v445 = vsub.s32 7, %v444
        %v446 = vrot.slane %v320, %v445
        %v447 = vlaneseq
        %v448 = vshrl.u32 %v447, 7
        %v449 = vsub.s32 0, %v448
        %v450 = vrot.slane %v322, %v449
        %v451 = vlaneseq
        %v452 = vshrl.u32 %v451, 7
        %v453 = vsub.s32 1, %v452
        %v454 = vrot.slane %v322, %v453
        %v455 = vlaneseq
        %v456 = vshrl.u32 %v455, 7
        %v457 = vsub.s32 2, %v456
        %v458 = vrot.slane %v322, %v457
        %v459 = vlaneseq
        %v460 = vshrl.u32 %v459, 7
        %v461 = vsub.s32 3, %v460
        %v462 = vrot.slane %v322, %v461
        %v463 = vlaneseq
        %v464 = vshrl.u32 %v463, 7
        %v465 = vsub.s32 4, %v464
        %v466 = vrot.slane %v322, %v465
        %v467 = vlaneseq
        %v468 = vshrl.u32 %v467, 7
        %v469 = vsub.s32 5, %v468
        %v470 = vrot.slane %v322, %v469
        %v471 = vlaneseq
        %v472 = vshrl.u32 %v471, 7
        %v473 = vsub.s32 6, %v472
        %v474 = vrot.slane %v322, %v473
        %v475 = vlaneseq
        %v476 = vshrl.u32 %v475, 7
        %v477 = vsub.s32 7, %v476
        %v478 = vrot.slane %v322, %v477
        %v479 = vlaneseq
        %v480 = vshrl.u32 %v479, 7
        %v481 = vsub.s32 0, %v480
        %v482 = vrot.slane %v324, %v481
        %v483 = vlaneseq
        %v484 = vshrl.u32 %v483, 7
        %v485 = vsub.s32 1, %v484
        %v486 = vrot.slane %v324, %v485
        %v487 = vlaneseq
        %v488 = vshrl.u32 %v487, 7
        %v489 = vsub.s32 2, %v488
        %v490 = vrot.slane %v324, %v489
        %v491 = vlaneseq
        %v492 = vshrl.u32 %v491, 7
        %v493 = vsub.s32 3, %v492
        %v494 = vrot.slane %v324, %v493
        %v495 = vlaneseq
        %v496 = vshrl.u32 %v495, 7
        %v497 = vsub.s32 4, %v496
        %v498 = vrot.slane %v324, %v497
        %v499 = vlaneseq
        %v500 = vshrl.u32 %v499, 7
        %v501 = vsub.s32 5, %v500
        %v502 = vrot.slane %v324, %v501
        %v503 = vlaneseq
        %v504 = vshrl.u32 %v503, 7
        %v505 = vsub.s32 6, %v504
        %v506 = vrot.slane %v324, %v505
        %v507 = vlaneseq
        %v508 = vshrl.u32 %v507, 7
        %v509 = vsub.s32 7, %v508
        %v510 = vrot.slane %v324, %v509
        %v511 = vlaneseq
        %v512 = vshrl.u32 %v511, 7
        %v513 = vsub.s32 0, %v512
        %v514 = vrot.slane %v326, %v513
        %v515 = vlaneseq
        %v516 = vshrl.u32 %v515, 7
        %v517 = vsub.s32 1, %v516
        %v518 = vrot.slane %v326, %v517
        %v519 = vlaneseq
        %v520 = vshrl.u32 %v519, 7
        %v521 = vsub.s32 2, %v520
        %v522 = vrot.slane %v326, %v521
        %v523 = vlaneseq
        %v524 = vshrl.u32 %v523, 7
        %v525 = vsub.s32 3, %v524
        %v526 = vrot.slane %v326, %v525
        %v527 = vlaneseq
        %v528 = vshrl.u32 %v527, 7
        %v529 = vsub.s32 4, %v528
        %v530 = vrot.slane %v326, %v529
        %v531 = vlaneseq
        %v532 = vshrl.u32 %v531, 7
        %v533 = vsub.s32 5, %v532
        %v534 = vrot.slane %v326, %v533
        %v535 = vlaneseq
        %v536 = vshrl.u32 %v535, 7
        %v537 = vsub.s32 6, %v536
        %v538 = vrot.slane %v326, %v537
        %v539 = vlaneseq
        %v540 = vshrl.u32 %v539, 7
        %v541 = vsub.s32 7, %v540
        %v542 = vrot.slane %v326, %v541
        %v543 = vlaneseq
        %v544 = vshrl.u32 %v543, 7
        %v545 = vsub.s32 0, %v544
        %v546 = vrot.slane %v328, %v545
        %v547 = vlaneseq
        %v548 = vshrl.u32 %v547, 7
        %v549 = vsub.s32 1, %v548
        %v550 = vrot.slane %v328, %v549
        %v551 = vlaneseq
        %v552 = vshrl.u32 %v551, 7
        %v553 = vsub.s32 2, %v552
        %v554 = vrot.slane %v328, %v553
        %v555 = vlaneseq
        %v556 = vshrl.u32 %v555, 7
        %v557 = vsub.s32 3, %v556
        %v558 = vrot.slane %v328, %v557
        %v559 = vlaneseq
        %v560 = vshrl.u32 %v559, 7
        %v561 = vsub.s32 4, %v560
        %v562 = vrot.slane %v328, %v561
        %v563 = vlaneseq
        %v564 = vshrl.u32 %v563, 7
        %v565 = vsub.s32 5, %v564
        %v566 = vrot.slane %v328, %v565
        %v567 = vlaneseq
        %v568 = vshrl.u32 %v567, 7
        %v569 = vsub.s32 6, %v568
        %v570 = vrot.slane %v328, %v569
        %v571 = vlaneseq
        %v572 = vshrl.u32 %v571, 7
        %v573 = vsub.s32 7, %v572
        %v574 = vrot.slane %v328, %v573
        %v575 = vlaneseq
        %v576 = vshrl.u32 %v575, 7
        %v577 = vsub.s32 0, %v576
        %v578 = vrot.slane %v330, %v577
        %v579 = vlaneseq
        %v580 = vshrl.u32 %v579, 7
        %v581 = vsub.s32 1, %v580
        %v582 = vrot.slane %v330, %v581
        %v583 = vlaneseq
        %v584 = vshrl.u32 %v583, 7
        %v585 = vsub.s32 2, %v584
        %v586 = vrot.slane %v330, %v585
        %v587 = vlaneseq
        %v588 = vshrl.u32 %v587, 7
        %v589 = vsub.s32 3, %v588
        %v590 = vrot.slane %v330, %v589
        %v591 = vlaneseq
        %v592 = vshrl.u32 %v591, 7
        %v593 = vsub.s32 4, %v592
        %v594 = vrot.slane %v330, %v593
        %v595 = vlaneseq
        %v596 = vshrl.u32 %v595, 7
        %v597 = vsub.s32 5, %v596
        %v598 = vrot.slane %v330, %v597
        %v599 = vlaneseq
        %v600 = vshrl.u32 %v599, 7
        %v601 = vsub.s32 6, %v600
        %v602 = vrot.slane %v330, %v601
        %v603 = vlaneseq
        %v604 = vshrl.u32 %v603, 7
        %v605 = vsub.s32 7, %v604
        %v606 = vrot.slane %v330, %v605
        %v607 = vlaneseq
        %v608 = vshrl.u32 %v607, 7
        %v609 = vsub.s32 0, %v608
        %v610 = vrot.slane %v332, %v609
        %v611 = vlaneseq
        %v612 = vshrl.u32 %v611, 7
        %v613 = vsub.s32 1, %v612
        %v614 = vrot.slane %v332, %v613
        %v615 = vlaneseq
        %v616 = vshrl.u32 %v615, 7
        %v617 = vsub.s32 2, %v616
        %v618 = vrot.slane %v332, %v617
        %v619 = vlaneseq
        %v620 = vshrl.u32 %v619, 7
        %v621 = vsub.s32 3, %v620
        %v622 = vrot.slane %v332, %v621
        %v623 = vlaneseq
        %v624 = vshrl.u32 %v623, 7
        %v625 = vsub.s32 4, %v624
        %v626 = vrot.slane %v332, %v625
        %v627 = vlaneseq
        %v628 = vshrl.u32 %v627, 7
        %v629 = vsub.s32 5, %v628
        %v630 = vrot.slane %v332, %v629
        %v631 = vlaneseq
        %v632 = vshrl.u32 %v631, 7
        %v633 = vsub.s32 6, %v632
        %v634 = vrot.slane %v332, %v633
        %v635 = vlaneseq
        %v636 = vshrl.u32 %v635, 7
        %v637 = vsub.s32 7, %v636
        %v638 = vrot.slane %v332, %v637
        %v639 = vlaneseq
        %v640 = vshrl.u32 %v639, 7
        %v641 = vsub.s32 0, %v640
        %v642 = vrot.slane %v334, %v641
        %v643 = vlaneseq
        %v644 = vshrl.u32 %v643, 7
        %v645 = vsub.s32 1, %v644
        %v646 = vrot.slane %v334, %v645
        %v647 = vlaneseq
        %v648 = vshrl.u32 %v647, 7
        %v649 = vsub.s32 2, %v648
        %v650 = vrot.slane %v334, %v649
        %v651 = vlaneseq
        %v652 = vshrl.u32 %v651, 7
        %v653 = vsub.s32 3, %v652
        %v654 = vrot.slane %v334, %v653
        %v655 = vlaneseq
        %v656 = vshrl.u32 %v655, 7
        %v657 = vsub.s32 4, %v656
        %v658 = vrot.slane %v334, %v657
        %v659 = vlaneseq
        %v660 = vshrl.u32 %v659, 7
        %v661 = vsub.s32 5, %v660
        %v662 = vrot.slane %v334, %v661
        %v663 = vlaneseq
        %v664 = vshrl.u32 %v663, 7
        %v665 = vsub.s32 6, %v664
        %v666 = vrot.slane %v334, %v665
        %v667 = vlaneseq
        %v668 = vshrl.u32 %v667, 7
        %v669 = vsub.s32 7, %v668
        %v670 = vrot.slane %v334, %v669
        %v671 = vlaneseq
        %v672 = vshrl.u32 %v671, 7
        %v673 = vsub.s32 0, %v672
        %v674 = vrot.slane %v336, %v673
        %v675 = vlaneseq
        %v676 = vshrl.u32 %v675, 7
        %v677 = vsub.s32 1, %v676
        %v678 = vrot.slane %v336, %v677
        %v679 = vlaneseq
        %v680 = vshrl.u32 %v679, 7
        %v681 = vsub.s32 2, %v680
        %v682 = vrot.slane %v336, %v681
        %v683 = vlaneseq
        %v684 = vshrl.u32 %v683, 7
        %v685 = vsub.s32 3, %v684
        %v686 = vrot.slane %v336, %v685
        %v687 = vlaneseq
        %v688 = vshrl.u32 %v687, 7
        %v689 = vsub.s32 4, %v688
        %v690 = vrot.slane %v336, %v689
        %v691 = vlaneseq
        %v692 = vshrl.u32 %v691, 7
        %v693 = vsub.s32 5, %v692
        %v694 = vrot.slane %v336, %v693
        %v695 = vlaneseq
        %v696 = vshrl.u32 %v695, 7
        %v697 = vsub.s32 6, %v696
        %v698 = vrot.slane %v336, %v697
        %v699 = vlaneseq
        %v700 = vshrl.u32 %v699, 7
        %v701 = vsub.s32 7, %v700
        %v702 = vrot.slane %v336, %v701
        %v703 = vlaneseq
        %v704 = vshrl.u32 %v703, 7
        %v705 = vsub.s32 0, %v704
        %v706 = vrot.slane %v338, %v705
        %v707 = vlaneseq
        %v708 = vshrl.u32 %v707, 7
        %v709 = vsub.s32 1, %v708
        %v710 = vrot.slane %v338, %v709
        %v711 = vlaneseq
        %v712 = vshrl.u32 %v711, 7
        %v713 = vsub.s32 2, %v712
        %v714 = vrot.slane %v338, %v713
        %v715 = vlaneseq
        %v716 = vshrl.u32 %v715, 7
        %v717 = vsub.s32 3, %v716
        %v718 = vrot.slane %v338, %v717
        %v719 = vlaneseq
        %v720 = vshrl.u32 %v719, 7
        %v721 = vsub.s32 4, %v720
        %v722 = vrot.slane %v338, %v721
        %v723 = vlaneseq
        %v724 = vshrl.u32 %v723, 7
        %v725 = vsub.s32 5, %v724
        %v726 = vrot.slane %v338, %v725
        %v727 = vlaneseq
        %v728 = vshrl.u32 %v727, 7
        %v729 = vsub.s32 6, %v728
        %v730 = vrot.slane %v338, %v729
        %v731 = vlaneseq
        %v732 = vshrl.u32 %v731, 7
        %v733 = vsub.s32 7, %v732
        %v734 = vrot.slane %v338, %v733
        %v735 = vlaneseq
        %v736 = vshrl.u32 %v735, 7
        %v737 = vsub.s32 0, %v736
        %v738 = vrot.slane %v340, %v737
        %v739 = vlaneseq
        %v740 = vshrl.u32 %v739, 7
        %v741 = vsub.s32 1, %v740
        %v742 = vrot.slane %v340, %v741
        %v743 = vlaneseq
        %v744 = vshrl.u32 %v743, 7
        %v745 = vsub.s32 2, %v744
        %v746 = vrot.slane %v340, %v745
        %v747 = vlaneseq
        %v748 = vshrl.u32 %v747, 7
        %v749 = vsub.s32 3, %v748
        %v750 = vrot.slane %v340, %v749
        %v751 = vlaneseq
        %v752 = vshrl.u32 %v751, 7
        %v753 = vsub.s32 4, %v752
        %v754 = vrot.slane %v340, %v753
        %v755 = vlaneseq
        %v756 = vshrl.u32 %v755, 7
        %v757 = vsub.s32 5, %v756
        %v758 = vrot.slane %v340, %v757
        %v759 = vlaneseq
        %v760 = vshrl.u32 %v759, 7
        %v761 = vsub.s32 6, %v760
        %v762 = vrot.slane %v340, %v761
        %v763 = vlaneseq
        %v764 = vshrl.u32 %v763, 7
        %v765 = vsub.s32 7, %v764
        %v766 = vrot.slane %v340, %v765
        %v767 = vlaneseq
        %v768 = vshrl.u32 %v767, 7
        %v769 = vsub.s32 0, %v768
        %v770 = vrot.slane %v342, %v769
        %v771 = vlaneseq
        %v772 = vshrl.u32 %v771, 7
        %v773 = vsub.s32 1, %v772
        %v774 = vrot.slane %v342, %v773
        %v775 = vlaneseq
        %v776 = vshrl.u32 %v775, 7
        %v777 = vsub.s32 2, %v776
        %v778 = vrot.slane %v342, %v777
        %v779 = vlaneseq
        %v780 = vshrl.u32 %v779, 7
        %v781 = vsub.s32 3, %v780
        %v782 = vrot.slane %v342, %v781
        %v783 = vlaneseq
        %v784 = vshrl.u32 %v783, 7
        %v785 = vsub.s32 4, %v784
        %v786 = vrot.slane %v342, %v785
        %v787 = vlaneseq
        %v788 = vshrl.u32 %v787, 7
        %v789 = vsub.s32 5, %v788
        %v790 = vrot.slane %v342, %v789
        %v791 = vlaneseq
        %v792 = vshrl.u32 %v791, 7
        %v793 = vsub.s32 6, %v792
        %v794 = vrot.slane %v342, %v793
        %v795 = vlaneseq
        %v796 = vshrl.u32 %v795, 7
        %v797 = vsub.s32 7, %v796
        %v798 = vrot.slane %v342, %v797
        %v799 = vlaneseq
        %v800 = vshrl.u32 %v799, 7
        %v801 = vsub.s32 0, %v800
        %v802 = vrot.slane %v344, %v801
        %v803 = vlaneseq
        %v804 = vshrl.u32 %v803, 7
        %v805 = vsub.s32 1, %v804
        %v806 = vrot.slane %v344, %v805
        %v807 = vlaneseq
        %v808 = vshrl.u32 %v807, 7
        %v809 = vsub.s32 2, %v808
        %v810 = vrot.slane %v344, %v809
        %v811 = vlaneseq
        %v812 = vshrl.u32 %v811, 7
        %v813 = vsub.s32 3, %v812
        %v814 = vrot.slane %v344, %v813
        %v815 = vlaneseq
        %v816 = vshrl.u32 %v815, 7
        %v817 = vsub.s32 4, %v816
        %v818 = vrot.slane %v344, %v817
        %v819 = vlaneseq
        %v820 = vshrl.u32 %v819, 7
        %v821 = vsub.s32 5, %v820
        %v822 = vrot.slane %v344, %v821
        %v823 = vlaneseq
        %v824 = vshrl.u32 %v823, 7
        %v825 = vsub.s32 6, %v824
        %v826 = vrot.slane %v344, %v825
        %v827 = vlaneseq
        %v828 = vshrl.u32 %v827, 7
        %v829 = vsub.s32 7, %v828
        %v830 = vrot.slane %v344, %v829
        %v831 = vlaneseq
        %v832 = vshrl.u32 %v831, 7
        %v833 = vsub.s32 0, %v832
        %v834 = vrot.slane %v346, %v833
        %v835 = vlaneseq
        %v836 = vshrl.u32 %v835, 7
        %v837 = vsub.s32 1, %v836
        %v838 = vrot.slane %v346, %v837
        %v839 = vlaneseq
        %v840 = vshrl.u32 %v839, 7
        %v841 = vsub.s32 2, %v840
        %v842 = vrot.slane %v346, %v841
        %v843 = vlaneseq
        %v844 = vshrl.u32 %v843, 7
        %v845 = vsub.s32 3, %v844
        %v846 = vrot.slane %v346, %v845
        %v847 = vlaneseq
        %v848 = vshrl.u32 %v847, 7
        %v849 = vsub.s32 4, %v848
        %v850 = vrot.slane %v346, %v849
        %v851 = vlaneseq
        %v852 = vshrl.u32 %v851, 7
        %v853 = vsub.s32 5, %v852
        %v854 = vrot.slane %v346, %v853
        %v855 = vlaneseq
        %v856 = vshrl.u32 %v855, 7
        %v857 = vsub.s32 6, %v856
        %v858 = vrot.slane %v346, %v857
        %v859 = vlaneseq
        %v860 = vshrl.u32 %v859, 7
        %v861 = vsub.s32 7, %v860
        %v862 = vrot.slane %v346, %v861
        %v863 = vlaneseq
        %v864 = vshrl.u32 %v863, 7
        %v865 = vsub.s32 0, %v864
        %v866 = vrot.slane %v348, %v865
        %v867 = vlaneseq
        %v868 = vshrl.u32 %v867, 7
        %v869 = vsub.s32 1, %v868
        %v870 = vrot.slane %v348, %v869
        %v871 = vlaneseq
        %v872 = vshrl.u32 %v871, 7
        %v873 = vsub.s32 2, %v872
        %v874 = vrot.slane %v348, %v873
        %v875 = vlaneseq
        %v876 = vshrl.u32 %v875, 7
        %v877 = vsub.s32 3, %v876
        %v878 = vrot.slane %v348, %v877
        %v879 = vlaneseq
        %v880 = vshrl.u32 %v879, 7
        %v881 = vsub.s32 4, %v880
        %v882 = vrot.slane %v348, %v881
        %v883 = vlaneseq
        %v884 = vshrl.u32 %v883, 7
        %v885 = vsub.s32 5, %v884
        %v886 = vrot.slane %v348, %v885
        %v887 = vlaneseq
        %v888 = vshrl.u32 %v887, 7
        %v889 = vsub.s32 6, %v888
        %v890 = vrot.slane %v348, %v889
        %v891 = vlaneseq
        %v892 = vshrl.u32 %v891, 7
        %v893 = vsub.s32 7, %v892
        %v894 = vrot.slane %v348, %v893
        %v895 = vlaneseq
        %v896 = vshrl.u32 %v895, 7
        %v897 = vsub.s32 0, %v896
        %v898 = vrot.slane %v350, %v897
        %v899 = vlaneseq
        %v900 = vshrl.u32 %v899, 7
        %v901 = vsub.s32 1, %v900
        %v902 = vrot.slane %v350, %v901
        %v903 = vlaneseq
        %v904 = vshrl.u32 %v903, 7
        %v905 = vsub.s32 2, %v904
        %v906 = vrot.slane %v350, %v905
        %v907 = vlaneseq
        %v908 = vshrl.u32 %v907, 7
        %v909 = vsub.s32 3, %v908
        %v910 = vrot.slane %v350, %v909
        %v911 = vlaneseq
        %v912 = vshrl.u32 %v911, 7
        %v913 = vsub.s32 4, %v912
        %v914 = vrot.slane %v350, %v913
        %v915 = vlaneseq
        %v916 = vshrl.u32 %v915, 7
        %v917 = vsub.s32 5, %v916
        %v918 = vrot.slane %v350, %v917
        %v919 = vlaneseq
        %v920 = vshrl.u32 %v919, 7
        %v921 = vsub.s32 6, %v920
        %v922 = vrot.slane %v350, %v921
        %v923 = vlaneseq
        %v924 = vshrl.u32 %v923, 7
        %v925 = vsub.s32 7, %v924
        %v926 = vrot.slane %v350, %v925
        %v927 = vlaneseq
        %v928 = vshrl.u32 %v927, 7
        %v929 = vsub.s32 0, %v928
        %v930 = vrot.slane %v352, %v929
        %v931 = vlaneseq
        %v932 = vshrl.u32 %v931, 7
        %v933 = vsub.s32 1, %v932
        %v934 = vrot.slane %v352, %v933
        %v935 = vlaneseq
        %v936 = vshrl.u32 %v935, 7
        %v937 = vsub.s32 2, %v936
        %v938 = vrot.slane %v352, %v937
        %v939 = vlaneseq
        %v940 = vshrl.u32 %v939, 7
        %v941 = vsub.s32 3, %v940
        %v942 = vrot.slane %v352, %v941
        %v943 = vlaneseq
        %v944 = vshrl.u32 %v943, 7
        %v945 = vsub.s32 4, %v944
        %v946 = vrot.slane %v352, %v945
        %v947 = vlaneseq
        %v948 = vshrl.u32 %v947, 7
        %v949 = vsub.s32 5, %v948
        %v950 = vrot.slane %v352, %v949
        %v951 = vlaneseq
        %v952 = vshrl.u32 %v951, 7
        %v953 = vsub.s32 6, %v952
        %v954 = vrot.slane %v352, %v953
        %v955 = vlaneseq
        %v956 = vshrl.u32 %v955, 7
        %v957 = vsub.s32 7, %v956
        %v958 = vrot.slane %v352, %v957
        %v959 = vlaneseq
        %v960 = vshrl.u32 %v959, 7
        %v961 = vsub.s32 0, %v960
        %v962 = vrot.slane %v354, %v961
        %v963 = vlaneseq
        %v964 = vshrl.u32 %v963, 7
        %v965 = vsub.s32 1, %v964
        %v966 = vrot.slane %v354, %v965
        %v967 = vlaneseq
        %v968 = vshrl.u32 %v967, 7
        %v969 = vsub.s32 2, %v968
        %v970 = vrot.slane %v354, %v969
        %v971 = vlaneseq
        %v972 = vshrl.u32 %v971, 7
        %v973 = vsub.s32 3, %v972
        %v974 = vrot.slane %v354, %v973
        %v975 = vlaneseq
        %v976 = vshrl.u32 %v975, 7
        %v977 = vsub.s32 4, %v976
        %v978 = vrot.slane %v354, %v977
        %v979 = vlaneseq
        %v980 = vshrl.u32 %v979, 7
        %v981 = vsub.s32 5, %v980
        %v982 = vrot.slane %v354, %v981
        %v983 = vlaneseq
        %v984 = vshrl.u32 %v983, 7
        %v985 = vsub.s32 6, %v984
        %v986 = vrot.slane %v354, %v985
        %v987 = vlaneseq
        %v988 = vshrl.u32 %v987, 7
        %v989 = vsub.s32 7, %v988
        %v990 = vrot.slane %v354, %v989
        %v991 = vlaneseq
        %v992 = vshrl.u32 %v991, 7
        %v993 = vsub.s32 0, %v992
        %v994 = vrot.slane %v356, %v993
        %v995 = vlaneseq
        %v996 = vshrl.u32 %v995, 7
        %v997 = vsub.s32 1, %v996
        %v998 = vrot.slane %v356, %v997
        %v999 = vlaneseq
        %v1000 = vshrl.u32 %v999, 7
        %v1001 = vsub.s32 2, %v1000
        %v1002 = vrot.slane %v356, %v1001
        %v1003 = vlaneseq
        %v1004 = vshrl.u32 %v1003, 7
        %v1005 = vsub.s32 3, %v1004
        %v1006 = vrot.slane %v356, %v1005
        %v1007 = vlaneseq
        %v1008 = vshrl.u32 %v1007, 7
        %v1009 = vsub.s32 4, %v1008
        %v1010 = vrot.slane %v356, %v1009
        %v1011 = vlaneseq
        %v1012 = vshrl.u32 %v1011, 7
        %v1013 = vsub.s32 5, %v1012
        %v1014 = vrot.slane %v356, %v1013
        %v1015 = vlaneseq
        %v1016 = vshrl.u32 %v1015, 7
        %v1017 = vsub.s32 6, %v1016
        %v1018 = vrot.slane %v356, %v1017
        %v1019 = vlaneseq
        %v1020 = vshrl.u32 %v1019, 7
        %v1021 = vsub.s32 7, %v1020
        %v1022 = vrot.slane %v356, %v1021
        %v1023 = vlaneseq
        %v1024 = vshrl.u32 %v1023, 7
        %v1025 = vsub.s32 0, %v1024
        %v1026 = vrot.slane %v358, %v1025
        %v1027 = vlaneseq
        %v1028 = vshrl.u32 %v1027, 7
        %v1029 = vsub.s32 1, %v1028
        %v1030 = vrot.slane %v358, %v1029
        %v1031 = vlaneseq
        %v1032 = vshrl.u32 %v1031, 7
        %v1033 = vsub.s32 2, %v1032
        %v1034 = vrot.slane %v358, %v1033
        %v1035 = vlaneseq
        %v1036 = vshrl.u32 %v1035, 7
        %v1037 = vsub.s32 3, %v1036
        %v1038 = vrot.slane %v358, %v1037
        %v1039 = vlaneseq
        %v1040 = vshrl.u32 %v1039, 7
        %v1041 = vsub.s32 4, %v1040
        %v1042 = vrot.slane %v358, %v1041
        %v1043 = vlaneseq
        %v1044 = vshrl.u32 %v1043, 7
        %v1045 = vsub.s32 5, %v1044
        %v1046 = vrot.slane %v358, %v1045
        %v1047 = vlaneseq
        %v1048 = vshrl.u32 %v1047, 7
        %v1049 = vsub.s32 6, %v1048
        %v1050 = vrot.slane %v358, %v1049
        %v1051 = vlaneseq
        %v1052 = vshrl.u32 %v1051, 7
        %v1053 = vsub.s32 7, %v1052
        %v1054 = vrot.slane %v358, %v1053
        %v1055 = vlaneseq
        %v1056 = vshrl.u32 %v1055, 7
        %v1057 = vsub.s32 0, %v1056
        %v1058 = vrot.slane %v360, %v1057
        %v1059 = vlaneseq
        %v1060 = vshrl.u32 %v1059, 7
        %v1061 = vsub.s32 1, %v1060
        %v1062 = vrot.slane %v360, %v1061
        %v1063 = vlaneseq
        %v1064 = vshrl.u32 %v1063, 7
        %v1065 = vsub.s32 2, %v1064
        %v1066 = vrot.slane %v360, %v1065
        %v1067 = vlaneseq
        %v1068 = vshrl.u32 %v1067, 7
        %v1069 = vsub.s32 3, %v1068
        %v1070 = vrot.slane %v360, %v1069
        %v1071 = vlaneseq
        %v1072 = vshrl.u32 %v1071, 7
        %v1073 = vsub.s32 4, %v1072
        %v1074 = vrot.slane %v360, %v1073
        %v1075 = vlaneseq
        %v1076 = vshrl.u32 %v1075, 7
        %v1077 = vsub.s32 5, %v1076
        %v1078 = vrot.slane %v360, %v1077
        %v1079 = vlaneseq
        %v1080 = vshrl.u32 %v1079, 7
        %v1081 = vsub.s32 6, %v1080
        %v1082 = vrot.slane %v360, %v1081
        %v1083 = vlaneseq
        %v1084 = vshrl.u32 %v1083, 7
        %v1085 = vsub.s32 7, %v1084
        %v1086 = vrot.slane %v360, %v1085
        %v1087 = vlaneseq
        %v1088 = vshrl.u32 %v1087, 7
        %v1089 = vsub.s32 0, %v1088
        %v1090 = vrot.slane %v362, %v1089
        %v1091 = vlaneseq
        %v1092 = vshrl.u32 %v1091, 7
        %v1093 = vsub.s32 1, %v1092
        %v1094 = vrot.slane %v362, %v1093
        %v1095 = vlaneseq
        %v1096 = vshrl.u32 %v1095, 7
        %v1097 = vsub.s32 2, %v1096
        %v1098 = vrot.slane %v362, %v1097
        %v1099 = vlaneseq
        %v1100 = vshrl.u32 %v1099, 7
        %v1101 = vsub.s32 3, %v1100
        %v1102 = vrot.slane %v362, %v1101
        %v1103 = vlaneseq
        %v1104 = vshrl.u32 %v1103, 7
        %v1105 = vsub.s32 4, %v1104
        %v1106 = vrot.slane %v362, %v1105
        %v1107 = vlaneseq
        %v1108 = vshrl.u32 %v1107, 7
        %v1109 = vsub.s32 5, %v1108
        %v1110 = vrot.slane %v362, %v1109
        %v1111 = vlaneseq
        %v1112 = vshrl.u32 %v1111, 7
        %v1113 = vsub.s32 6, %v1112
        %v1114 = vrot.slane %v362, %v1113
        %v1115 = vlaneseq
        %v1116 = vshrl.u32 %v1115, 7
        %v1117 = vsub.s32 7, %v1116
        %v1118 = vrot.slane %v362, %v1117
        %v1119 = vlaneseq
        %v1120 = vshrl.u32 %v1119, 7
        %v1121 = vsub.s32 0, %v1120
        %v1122 = vrot.slane %v364, %v1121
        %v1123 = vlaneseq
        %v1124 = vshrl.u32 %v1123, 7
        %v1125 = vsub.s32 1, %v1124
        %v1126 = vrot.slane %v364, %v1125
        %v1127 = vlaneseq
        %v1128 = vshrl.u32 %v1127, 7
        %v1129 = vsub.s32 2, %v1128
        %v1130 = vrot.slane %v364, %v1129
        %v1131 = vlaneseq
        %v1132 = vshrl.u32 %v1131, 7
        %v1133 = vsub.s32 3, %v1132
        %v1134 = vrot.slane %v364, %v1133
        %v1135 = vlaneseq
        %v1136 = vshrl.u32 %v1135, 7
        %v1137 = vsub.s32 4, %v1136
        %v1138 = vrot.slane %v364, %v1137
        %v1139 = vlaneseq
        %v1140 = vshrl.u32 %v1139, 7
        %v1141 = vsub.s32 5, %v1140
        %v1142 = vrot.slane %v364, %v1141
        %v1143 = vlaneseq
        %v1144 = vshrl.u32 %v1143, 7
        %v1145 = vsub.s32 6, %v1144
        %v1146 = vrot.slane %v364, %v1145
        %v1147 = vlaneseq
        %v1148 = vshrl.u32 %v1147, 7
        %v1149 = vsub.s32 7, %v1148
        %v1150 = vrot.slane %v364, %v1149
        %v1151 = vlaneseq
        %v1152 = vshrl.u32 %v1151, 7
        %v1153 = vsub.s32 0, %v1152
        %v1154 = vrot.slane %v366, %v1153
        %v1155 = vlaneseq
        %v1156 = vshrl.u32 %v1155, 7
        %v1157 = vsub.s32 1, %v1156
        %v1158 = vrot.slane %v366, %v1157
        %v1159 = vlaneseq
        %v1160 = vshrl.u32 %v1159, 7
        %v1161 = vsub.s32 2, %v1160
        %v1162 = vrot.slane %v366, %v1161
        %v1163 = vlaneseq
        %v1164 = vshrl.u32 %v1163, 7
        %v1165 = vsub.s32 3, %v1164
        %v1166 = vrot.slane %v366, %v1165
        %v1167 = vlaneseq
        %v1168 = vshrl.u32 %v1167, 7
        %v1169 = vsub.s32 4, %v1168
        %v1170 = vrot.slane %v366, %v1169
        %v1171 = vlaneseq
        %v1172 = vshrl.u32 %v1171, 7
        %v1173 = vsub.s32 5, %v1172
        %v1174 = vrot.slane %v366, %v1173
        %v1175 = vlaneseq
        %v1176 = vshrl.u32 %v1175, 7
        %v1177 = vsub.s32 6, %v1176
        %v1178 = vrot.slane %v366, %v1177
        %v1179 = vlaneseq
        %v1180 = vshrl.u32 %v1179, 7
        %v1181 = vsub.s32 7, %v1180
        %v1182 = vrot.slane %v366, %v1181
        %v1183 = vlaneseq
        %v1184 = vshrl.u32 %v1183, 7
        %v1185 = vsub.s32 0, %v1184
        %v1186 = vrot.slane %v368, %v1185
        %v1187 = vlaneseq
        %v1188 = vshrl.u32 %v1187, 7
        %v1189 = vsub.s32 1, %v1188
        %v1190 = vrot.slane %v368, %v1189
        %v1191 = vlaneseq
        %v1192 = vshrl.u32 %v1191, 7
        %v1193 = vsub.s32 2, %v1192
        %v1194 = vrot.slane %v368, %v1193
        %v1195 = vlaneseq
        %v1196 = vshrl.u32 %v1195, 7
        %v1197 = vsub.s32 3, %v1196
        %v1198 = vrot.slane %v368, %v1197
        %v1199 = vlaneseq
        %v1200 = vshrl.u32 %v1199, 7
        %v1201 = vsub.s32 4, %v1200
        %v1202 = vrot.slane %v368, %v1201
        %v1203 = vlaneseq
        %v1204 = vshrl.u32 %v1203, 7
        %v1205 = vsub.s32 5, %v1204
        %v1206 = vrot.slane %v368, %v1205
        %v1207 = vlaneseq
        %v1208 = vshrl.u32 %v1207, 7
        %v1209 = vsub.s32 6, %v1208
        %v1210 = vrot.slane %v368, %v1209
        %v1211 = vlaneseq
        %v1212 = vshrl.u32 %v1211, 7
        %v1213 = vsub.s32 7, %v1212
        %v1214 = vrot.slane %v368, %v1213
        %v1215 = vlaneseq
        %v1216 = vshrl.u32 %v1215, 7
        %v1217 = vsub.s32 0, %v1216
        %v1218 = vrot.slane %v370, %v1217
        %v1219 = vlaneseq
        %v1220 = vshrl.u32 %v1219, 7
        %v1221 = vsub.s32 1, %v1220
        %v1222 = vrot.slane %v370, %v1221
        %v1223 = vlaneseq
        %v1224 = vshrl.u32 %v1223, 7
        %v1225 = vsub.s32 2, %v1224
        %v1226 = vrot.slane %v370, %v1225
        %v1227 = vlaneseq
        %v1228 = vshrl.u32 %v1227, 7
        %v1229 = vsub.s32 3, %v1228
        %v1230 = vrot.slane %v370, %v1229
        %v1231 = vlaneseq
        %v1232 = vshrl.u32 %v1231, 7
        %v1233 = vsub.s32 4, %v1232
        %v1234 = vrot.slane %v370, %v1233
        %v1235 = vlaneseq
        %v1236 = vshrl.u32 %v1235, 7
        %v1237 = vsub.s32 5, %v1236
        %v1238 = vrot.slane %v370, %v1237
        %v1239 = vlaneseq
        %v1240 = vshrl.u32 %v1239, 7
        %v1241 = vsub.s32 6, %v1240
        %v1242 = vrot.slane %v370, %v1241
        %v1243 = vlaneseq
        %v1244 = vshrl.u32 %v1243, 7
        %v1245 = vsub.s32 7, %v1244
        %v1246 = vrot.slane %v370, %v1245
        %v1247 = vlaneseq
        %v1248 = vshrl.u32 %v1247, 7
        %v1249 = vsub.s32 0, %v1248
        %v1250 = vrot.slane %v372, %v1249
        %v1251 = vlaneseq
        %v1252 = vshrl.u32 %v1251, 7
        %v1253 = vsub.s32 1, %v1252
        %v1254 = vrot.slane %v372, %v1253
        %v1255 = vlaneseq
        %v1256 = vshrl.u32 %v1255, 7
        %v1257 = vsub.s32 2, %v1256
        %v1258 = vrot.slane %v372, %v1257
        %v1259 = vlaneseq
        %v1260 = vshrl.u32 %v1259, 7
        %v1261 = vsub.s32 3, %v1260
        %v1262 = vrot.slane %v372, %v1261
        %v1263 = vlaneseq
        %v1264 = vshrl.u32 %v1263, 7
        %v1265 = vsub.s32 4, %v1264
        %v1266 = vrot.slane %v372, %v1265
        %v1267 = vlaneseq
        %v1268 = vshrl.u32 %v1267, 7
        %v1269 = vsub.s32 5, %v1268
        %v1270 = vrot.slane %v372, %v1269
        %v1271 = vlaneseq
        %v1272 = vshrl.u32 %v1271, 7
        %v1273 = vsub.s32 6, %v1272
        %v1274 = vrot.slane %v372, %v1273
        %v1275 = vlaneseq
        %v1276 = vshrl.u32 %v1275, 7
        %v1277 = vsub.s32 7, %v1276
        %v1278 = vrot.slane %v372, %v1277
        %v1279 = vlaneseq
        %v1280 = vshrl.u32 %v1279, 7
        %v1281 = vsub.s32 0, %v1280
        %v1282 = vrot.slane %v374, %v1281
        %v1283 = vlaneseq
        %v1284 = vshrl.u32 %v1283, 7
        %v1285 = vsub.s32 1, %v1284
        %v1286 = vrot.slane %v374, %v1285
        %v1287 = vlaneseq
        %v1288 = vshrl.u32 %v1287, 7
        %v1289 = vsub.s32 2, %v1288
        %v1290 = vrot.slane %v374, %v1289
        %v1291 = vlaneseq
        %v1292 = vshrl.u32 %v1291, 7
        %v1293 = vsub.s32 3, %v1292
        %v1294 = vrot.slane %v374, %v1293
        %v1295 = vlaneseq
        %v1296 = vshrl.u32 %v1295, 7
        %v1297 = vsub.s32 4, %v1296
        %v1298 = vrot.slane %v374, %v1297
        %v1299 = vlaneseq
        %v1300 = vshrl.u32 %v1299, 7
        %v1301 = vsub.s32 5, %v1300
        %v1302 = vrot.slane %v374, %v1301
        %v1303 = vlaneseq
        %v1304 = vshrl.u32 %v1303, 7
        %v1305 = vsub.s32 6, %v1304
        %v1306 = vrot.slane %v374, %v1305
        %v1307 = vlaneseq
        %v1308 = vshrl.u32 %v1307, 7
        %v1309 = vsub.s32 7, %v1308
        %v1310 = vrot.slane %v374, %v1309
        %v1311 = vlaneseq
        %v1312 = vshrl.u32 %v1311, 7
        %v1313 = vsub.s32 0, %v1312
        %v1314 = vrot.slane %v376, %v1313
        %v1315 = vlaneseq
        %v1316 = vshrl.u32 %v1315, 7
        %v1317 = vsub.s32 1, %v1316
        %v1318 = vrot.slane %v376, %v1317
        %v1319 = vlaneseq
        %v1320 = vshrl.u32 %v1319, 7
        %v1321 = vsub.s32 2, %v1320
        %v1322 = vrot.slane %v376, %v1321
        %v1323 = vlaneseq
        %v1324 = vshrl.u32 %v1323, 7
        %v1325 = vsub.s32 3, %v1324
        %v1326 = vrot.slane %v376, %v1325
        %v1327 = vlaneseq
        %v1328 = vshrl.u32 %v1327, 7
        %v1329 = vsub.s32 4, %v1328
        %v1330 = vrot.slane %v376, %v1329
        %v1331 = vlaneseq
        %v1332 = vshrl.u32 %v1331, 7
        %v1333 = vsub.s32 5, %v1332
        %v1334 = vrot.slane %v376, %v1333
        %v1335 = vlaneseq
        %v1336 = vshrl.u32 %v1335, 7
        %v1337 = vsub.s32 6, %v1336
        %v1338 = vrot.slane %v376, %v1337
        %v1339 = vlaneseq
        %v1340 = vshrl.u32 %v1339, 7
        %v1341 = vsub.s32 7, %v1340
        %v1342 = vrot.slane %v376, %v1341
        %v1343 = vlaneseq
        %v1344 = vshrl.u32 %v1343, 7
        %v1345 = vsub.s32 0, %v1344
        %v1346 = vrot.slane %v378, %v1345
        %v1347 = vlaneseq
        %v1348 = vshrl.u32 %v1347, 7
        %v1349 = vsub.s32 1, %v1348
        %v1350 = vrot.slane %v378, %v1349
        %v1351 = vlaneseq
        %v1352 = vshrl.u32 %v1351, 7
        %v1353 = vsub.s32 2, %v1352
        %v1354 = vrot.slane %v378, %v1353
        %v1355 = vlaneseq
        %v1356 = vshrl.u32 %v1355, 7
        %v1357 = vsub.s32 3, %v1356
        %v1358 = vrot.slane %v378, %v1357
        %v1359 = vlaneseq
        %v1360 = vshrl.u32 %v1359, 7
        %v1361 = vsub.s32 4, %v1360
        %v1362 = vrot.slane %v378, %v1361
        %v1363 = vlaneseq
        %v1364 = vshrl.u32 %v1363, 7
        %v1365 = vsub.s32 5, %v1364
        %v1366 = vrot.slane %v378, %v1365
        %v1367 = vlaneseq
        %v1368 = vshrl.u32 %v1367, 7
        %v1369 = vsub.s32 6, %v1368
        %v1370 = vrot.slane %v378, %v1369
        %v1371 = vlaneseq
        %v1372 = vshrl.u32 %v1371, 7
        %v1373 = vsub.s32 7, %v1372
        %v1374 = vrot.slane %v378, %v1373
        %v1375 = vlaneseq
        %v1376 = vshrl.u32 %v1375, 7
        %v1377 = vsub.s32 0, %v1376
        %v1378 = vrot.slane %v380, %v1377
        %v1379 = vlaneseq
        %v1380 = vshrl.u32 %v1379, 7
        %v1381 = vsub.s32 1, %v1380
        %v1382 = vrot.slane %v380, %v1381
        %v1383 = vlaneseq
        %v1384 = vshrl.u32 %v1383, 7
        %v1385 = vsub.s32 2, %v1384
        %v1386 = vrot.slane %v380, %v1385
        %v1387 = vlaneseq
        %v1388 = vshrl.u32 %v1387, 7
        %v1389 = vsub.s32 3, %v1388
        %v1390 = vrot.slane %v380, %v1389
        %v1391 = vlaneseq
        %v1392 = vshrl.u32 %v1391, 7
        %v1393 = vsub.s32 4, %v1392
        %v1394 = vrot.slane %v380, %v1393
        %v1395 = vlaneseq
        %v1396 = vshrl.u32 %v1395, 7
        %v1397 = vsub.s32 5, %v1396
        %v1398 = vrot.slane %v380, %v1397
        %v1399 = vlaneseq
        %v1400 = vshrl.u32 %v1399, 7
        %v1401 = vsub.s32 6, %v1400
        %v1402 = vrot.slane %v380, %v1401
        %v1403 = vlaneseq
        %v1404 = vshrl.u32 %v1403, 7
        %v1405 = vsub.s32 7, %v1404
        %v1406 = vrot.slane %v380, %v1405
        %v1407 = vlaneseq
        %v1408 = vshrl.u32 %v1407, 7
        %v1409 = vsub.s32 0, %v1408
        %v1410 = vrot.slane %v382, %v1409
        %v1411 = vlaneseq
        %v1412 = vshrl.u32 %v1411, 7
        %v1413 = vsub.s32 1, %v1412
        %v1414 = vrot.slane %v382, %v1413
        %v1415 = vlaneseq
        %v1416 = vshrl.u32 %v1415, 7
        %v1417 = vsub.s32 2, %v1416
        %v1418 = vrot.slane %v382, %v1417
        %v1419 = vlaneseq
        %v1420 = vshrl.u32 %v1419, 7
        %v1421 = vsub.s32 3, %v1420
        %v1422 = vrot.slane %v382, %v1421
        %v1423 = vlaneseq
        %v1424 = vshrl.u32 %v1423, 7
        %v1425 = vsub.s32 4, %v1424
        %v1426 = vrot.slane %v382, %v1425
        %v1427 = vlaneseq
        %v1428 = vshrl.u32 %v1427, 7
        %v1429 = vsub.s32 5, %v1428
        %v1430 = vrot.slane %v382, %v1429
        %v1431 = vlaneseq
        %v1432 = vshrl.u32 %v1431, 7
        %v1433 = vsub.s32 6, %v1432
        %v1434 = vrot.slane %v382, %v1433
        %v1435 = vlaneseq
        %v1436 = vshrl.u32 %v1435, 7
        %v1437 = vsub.s32 7, %v1436
        %v1438 = vrot.slane %v382, %v1437
        %v1439 = vcombine.low %v418, %v422
        %v1440 = vcombine.low %v426, %v430
        %v1441 = vcombine.low %v434, %v438
        %v1442 = vcombine.low %v442, %v446
        %v1444 = vunpack.c.l.s4 1966171168
        %v1445 = vunpack.c.0.s8 %v1444
        %v1446 = vlaneseq
        %v1447 = vshrl.u32 %v1446, 7
        %v1448 = vsub.s32 %v1445, %v1447
        %v1449 = vrot.slane %v1439, %v1448
        %v1451 = vunpack.c.l.s4 1966171168
        %v1452 = vunpack.c.0.s8 %v1451
        %v1453 = vlaneseq
        %v1454 = vshrl.u32 %v1453, 7
        %v1455 = vsub.s32 %v1452, %v1454
        %v1456 = vrot.slane %v1440, %v1455
        %v1458 = vunpack.c.l.s4 1966171168
        %v1459 = vunpack.c.0.s8 %v1458
        %v1460 = vlaneseq
        %v1461 = vshrl.u32 %v1460, 7
        %v1462 = vsub.s32 %v1459, %v1461
        %v1463 = vrot.slane %v1441, %v1462
        %v1465 = vunpack.c.l.s4 1966171168
        %v1466 = vunpack.c.0.s8 %v1465
        %v1467 = vlaneseq
        %v1468 = vshrl.u32 %v1467, 7
        %v1469 = vsub.s32 %v1466, %v1468
        %v1470 = vrot.slane %v1442, %v1469
        %v1471 = vcombine.low %v1449, %v1456
        %v1472 = vcombine.low %v1463, %v1470
        %v1474 = vunpack.c.l.s4 1966171168
        %v1475 = vunpack.c.0.s8 %v1474
        %v1476 = vlaneseq
        %v1477 = vshrl.u32 %v1476, 7
        %v1478 = vsub.s32 %v1475, %v1477
        %v1479 = vrot.slane %v1471, %v1478
        %v1481 = vunpack.c.l.s4 1966171168
        %v1482 = vunpack.c.0.s8 %v1481
        %v1483 = vlaneseq
        %v1484 = vshrl.u32 %v1483, 7
        %v1485 = vsub.s32 %v1482, %v1484
        %v1486 = vrot.slane %v1472, %v1485
        %v1487 = vcombine.low %v1479, %v1486
        %v1488 = vcombine.low %v450, %v454
        %v1489 = vcombine.low %v458, %v462
        %v1490 = vcombine.low %v466, %v470
        %v1491 = vcombine.low %v474, %v478
        %v1493 = vunpack.c.l.s4 1966171168
        %v1494 = vunpack.c.0.s8 %v1493
        %v1495 = vlaneseq
        %v1496 = vshrl.u32 %v1495, 7
        %v1497 = vsub.s32 %v1494, %v1496
        %v1498 = vrot.slane %v1488, %v1497
        %v1500 = vunpack.c.l.s4 1966171168
        %v1501 = vunpack.c.0.s8 %v1500
        %v1502 = vlaneseq
        %v1503 = vshrl.u32 %v1502, 7
        %v1504 = vsub.s32 %v1501, %v1503
        %v1505 = vrot.slane %v1489, %v1504
        %v1507 = vunpack.c.l.s4 1966171168
        %v1508 = vunpack.c.0.s8 %v1507
        %v1509 = vlaneseq
        %v1510 = vshrl.u32 %v1509, 7
        %v1511 = vsub.s32 %v1508, %v1510
        %v1512 = vrot.slane %v1490, %v1511
        %v1514 = vunpack.c.l.s4 1966171168
        %v1515 = vunpack.c.0.s8 %v1514
        %v1516 = vlaneseq
        %v1517 = vshrl.u32 %v1516, 7
        %v1518 = vsub.s32 %v1515, %v1517
        %v1519 = vrot.slane %v1491, %v1518
        %v1520 = vcombine.low %v1498, %v1505
        %v1521 = vcombine.low %v1512, %v1519
        %v1523 = vunpack.c.l.s4 1966171168
        %v1524 = vunpack.c.0.s8 %v1523
        %v1525 = vlaneseq
        %v1526 = vshrl.u32 %v1525, 7
        %v1527 = vsub.s32 %v1524, %v1526
        %v1528 = vrot.slane %v1520, %v1527
        %v1530 = vunpack.c.l.s4 1966171168
        %v1531 = vunpack.c.0.s8 %v1530
        %v1532 = vlaneseq
        %v1533 = vshrl.u32 %v1532, 7
        %v1534 = vsub.s32 %v1531, %v1533
        %v1535 = vrot.slane %v1521, %v1534
        %v1536 = vcombine.low %v1528, %v1535
        %v1537 = vcombine.low %v482, %v486
        %v1538 = vcombine.low %v490, %v494
        %v1539 = vcombine.low %v498, %v502
        %v1540 = vcombine.low %v506, %v510
        %v1542 = vunpack.c.l.s4 1966171168
        %v1543 = vunpack.c.0.s8 %v1542
        %v1544 = vlaneseq
        %v1545 = vshrl.u32 %v1544, 7
        %v1546 = vsub.s32 %v1543, %v1545
        %v1547 = vrot.slane %v1537, %v1546
        %v1549 = vunpack.c.l.s4 1966171168
        %v1550 = vunpack.c.0.s8 %v1549
        %v1551 = vlaneseq
        %v1552 = vshrl.u32 %v1551, 7
        %v1553 = vsub.s32 %v1550, %v1552
        %v1554 = vrot.slane %v1538, %v1553
        %v1556 = vunpack.c.l.s4 1966171168
        %v1557 = vunpack.c.0.s8 %v1556
        %v1558 = vlaneseq
        %v1559 = vshrl.u32 %v1558, 7
        %v1560 = vsub.s32 %v1557, %v1559
        %v1561 = vrot.slane %v1539, %v1560
        %v1563 = vunpack.c.l.s4 1966171168
        %v1564 = vunpack.c.0.s8 %v1563
        %v1565 = vlaneseq
        %v1566 = vshrl.u32 %v1565, 7
        %v1567 = vsub.s32 %v1564, %v1566
        %v1568 = vrot.slane %v1540, %v1567
        %v1569 = vcombine.low %v1547, %v1554
        %v1570 = vcombine.low %v1561, %v1568
        %v1572 = vunpack.c.l.s4 1966171168
        %v1573 = vunpack.c.0.s8 %v1572
        %v1574 = vlaneseq
        %v1575 = vshrl.u32 %v1574, 7
        %v1576 = vsub.s32 %v1573, %v1575
        %v1577 = vrot.slane %v1569, %v1576
        %v1579 = vunpack.c.l.s4 1966171168
        %v1580 = vunpack.c.0.s8 %v1579
        %v1581 = vlaneseq
        %v1582 = vshrl.u32 %v1581, 7
        %v1583 = vsub.s32 %v1580, %v1582
        %v1584 = vrot.slane %v1570, %v1583
        %v1585 = vcombine.low %v1577, %v1584
        %v1586 = vcombine.low %v514, %v518
        %v1587 = vcombine.low %v522, %v526
        %v1588 = vcombine.low %v530, %v534
        %v1589 = vcombine.low %v538, %v542
        %v1591 = vunpack.c.l.s4 1966171168
        %v1592 = vunpack.c.0.s8 %v1591
        %v1593 = vlaneseq
        %v1594 = vshrl.u32 %v1593, 7
        %v1595 = vsub.s32 %v1592, %v1594
        %v1596 = vrot.slane %v1586, %v1595
        %v1598 = vunpack.c.l.s4 1966171168
        %v1599 = vunpack.c.0.s8 %v1598
        %v1600 = vlaneseq
        %v1601 = vshrl.u32 %v1600, 7
        %v1602 = vsub.s32 %v1599, %v1601
        %v1603 = vrot.slane %v1587, %v1602
        %v1605 = vunpack.c.l.s4 1966171168
        %v1606 = vunpack.c.0.s8 %v1605
        %v1607 = vlaneseq
        %v1608 = vshrl.u32 %v1607, 7
        %v1609 = vsub.s32 %v1606, %v1608
        %v1610 = vrot.slane %v1588, %v1609
        %v1612 = vunpack.c.l.s4 1966171168
        %v1613 = vunpack.c.0.s8 %v1612
        %v1614 = vlaneseq
        %v1615 = vshrl.u32 %v1614, 7
        %v1616 = vsub.s32 %v1613, %v1615
        %v1617 = vrot.slane %v1589, %v1616
        %v1618 = vcombine.low %v1596, %v1603
        %v1619 = vcombine.low %v1610, %v1617
        %v1621 = vunpack.c.l.s4 1966171168
        %v1622 = vunpack.c.0.s8 %v1621
        %v1623 = vlaneseq
        %v1624 = vshrl.u32 %v1623, 7
        %v1625 = vsub.s32 %v1622, %v1624
        %v1626 = vrot.slane %v1618, %v1625
        %v1628 = vunpack.c.l.s4 1966171168
        %v1629 = vunpack.c.0.s8 %v1628
        %v1630 = vlaneseq
        %v1631 = vshrl.u32 %v1630, 7
        %v1632 = vsub.s32 %v1629, %v1631
        %v1633 = vrot.slane %v1619, %v1632
        %v1634 = vcombine.low %v1626, %v1633
        %v1635 = vcombine.low %v546, %v550
        %v1636 = vcombine.low %v554, %v558
        %v1637 = vcombine.low %v562, %v566
        %v1638 = vcombine.low %v570, %v574
        %v1640 = vunpack.c.l.s4 1966171168
        %v1641 = vunpack.c.0.s8 %v1640
        %v1642 = vlaneseq
        %v1643 = vshrl.u32 %v1642, 7
        %v1644 = vsub.s32 %v1641, %v1643
        %v1645 = vrot.slane %v1635, %v1644
        %v1647 = vunpack.c.l.s4 1966171168
        %v1648 = vunpack.c.0.s8 %v1647
        %v1649 = vlaneseq
        %v1650 = vshrl.u32 %v1649, 7
        %v1651 = vsub.s32 %v1648, %v1650
        %v1652 = vrot.slane %v1636, %v1651
        %v1654 = vunpack.c.l.s4 1966171168
        %v1655 = vunpack.c.0.s8 %v1654
        %v1656 = vlaneseq
        %v1657 = vshrl.u32 %v1656, 7
        %v1658 = vsub.s32 %v1655, %v1657
        %v1659 = vrot.slane %v1637, %v1658
        %v1661 = vunpack.c.l.s4 1966171168
        %v1662 = vunpack.c.0.s8 %v1661
        %v1663 = vlaneseq
        %v1664 = vshrl.u32 %v1663, 7
        %v1665 = vsub.s32 %v1662, %v1664
        %v1666 = vrot.slane %v1638, %v1665
        %v1667 = vcombine.low %v1645, %v1652
        %v1668 = vcombine.low %v1659, %v1666
        %v1670 = vunpack.c.l.s4 1966171168
        %v1671 = vunpack.c.0.s8 %v1670
        %v1672 = vlaneseq
        %v1673 = vshrl.u32 %v1672, 7
        %v1674 = vsub.s32 %v1671, %v1673
        %v1675 = vrot.slane %v1667, %v1674
        %v1677 = vunpack.c.l.s4 1966171168
        %v1678 = vunpack.c.0.s8 %v1677
        %v1679 = vlaneseq
        %v1680 = vshrl.u32 %v1679, 7
        %v1681 = vsub.s32 %v1678, %v1680
        %v1682 = vrot.slane %v1668, %v1681
        %v1683 = vcombine.low %v1675, %v1682
        %v1684 = vcombine.low %v578, %v582
        %v1685 = vcombine.low %v586, %v590
        %v1686 = vcombine.low %v594, %v598
        %v1687 = vcombine.low %v602, %v606
        %v1689 = vunpack.c.l.s4 1966171168
        %v1690 = vunpack.c.0.s8 %v1689
        %v1691 = vlaneseq
        %v1692 = vshrl.u32 %v1691, 7
        %v1693 = vsub.s32 %v1690, %v1692
        %v1694 = vrot.slane %v1684, %v1693
        %v1696 = vunpack.c.l.s4 1966171168
        %v1697 = vunpack.c.0.s8 %v1696
        %v1698 = vlaneseq
        %v1699 = vshrl.u32 %v1698, 7
        %v1700 = vsub.s32 %v1697, %v1699
        %v1701 = vrot.slane %v1685, %v1700
        %v1703 = vunpack.c.l.s4 1966171168
        %v1704 = vunpack.c.0.s8 %v1703
        %v1705 = vlaneseq
        %v1706 = vshrl.u32 %v1705, 7
        %v1707 = vsub.s32 %v1704, %v1706
        %v1708 = vrot.slane %v1686, %v1707
        %v1710 = vunpack.c.l.s4 1966171168
        %v1711 = vunpack.c.0.s8 %v1710
        %v1712 = vlaneseq
        %v1713 = vshrl.u32 %v1712, 7
        %v1714 = vsub.s32 %v1711, %v1713
        %v1715 = vrot.slane %v1687, %v1714
        %v1716 = vcombine.low %v1694, %v1701
        %v1717 = vcombine.low %v1708, %v1715
        %v1719 = vunpack.c.l.s4 1966171168
        %v1720 = vunpack.c.0.s8 %v1719
        %v1721 = vlaneseq
        %v1722 = vshrl.u32 %v1721, 7
        %v1723 = vsub.s32 %v1720, %v1722
        %v1724 = vrot.slane %v1716, %v1723
        %v1726 = vunpack.c.l.s4 1966171168
        %v1727 = vunpack.c.0.s8 %v1726
        %v1728 = vlaneseq
        %v1729 = vshrl.u32 %v1728, 7
        %v1730 = vsub.s32 %v1727, %v1729
        %v1731 = vrot.slane %v1717, %v1730
        %v1732 = vcombine.low %v1724, %v1731
        %v1733 = vcombine.low %v610, %v614
        %v1734 = vcombine.low %v618, %v622
        %v1735 = vcombine.low %v626, %v630
        %v1736 = vcombine.low %v634, %v638
        %v1738 = vunpack.c.l.s4 1966171168
        %v1739 = vunpack.c.0.s8 %v1738
        %v1740 = vlaneseq
        %v1741 = vshrl.u32 %v1740, 7
        %v1742 = vsub.s32 %v1739, %v1741
        %v1743 = vrot.slane %v1733, %v1742
        %v1745 = vunpack.c.l.s4 1966171168
        %v1746 = vunpack.c.0.s8 %v1745
        %v1747 = vlaneseq
        %v1748 = vshrl.u32 %v1747, 7
        %v1749 = vsub.s32 %v1746, %v1748
        %v1750 = vrot.slane %v1734, %v1749
        %v1752 = vunpack.c.l.s4 1966171168
        %v1753 = vunpack.c.0.s8 %v1752
        %v1754 = vlaneseq
        %v1755 = vshrl.u32 %v1754, 7
        %v1756 = vsub.s32 %v1753, %v1755
        %v1757 = vrot.slane %v1735, %v1756
        %v1759 = vunpack.c.l.s4 1966171168
        %v1760 = vunpack.c.0.s8 %v1759
        %v1761 = vlaneseq
        %v1762 = vshrl.u32 %v1761, 7
        %v1763 = vsub.s32 %v1760, %v1762
        %v1764 = vrot.slane %v1736, %v1763
        %v1765 = vcombine.low %v1743, %v1750
        %v1766 = vcombine.low %v1757, %v1764
        %v1768 = vunpack.c.l.s4 1966171168
        %v1769 = vunpack.c.0.s8 %v1768
        %v1770 = vlaneseq
        %v1771 = vshrl.u32 %v1770, 7
        %v1772 = vsub.s32 %v1769, %v1771
        %v1773 = vrot.slane %v1765, %v1772
        %v1775 = vunpack.c.l.s4 1966171168
        %v1776 = vunpack.c.0.s8 %v1775
        %v1777 = vlaneseq
        %v1778 = vshrl.u32 %v1777, 7
        %v1779 = vsub.s32 %v1776, %v1778
        %v1780 = vrot.slane %v1766, %v1779
        %v1781 = vcombine.low %v1773, %v1780
        %v1782 = vcombine.low %v642, %v646
        %v1783 = vcombine.low %v650, %v654
        %v1784 = vcombine.low %v658, %v662
        %v1785 = vcombine.low %v666, %v670
        %v1787 = vunpack.c.l.s4 1966171168
        %v1788 = vunpack.c.0.s8 %v1787
        %v1789 = vlaneseq
        %v1790 = vshrl.u32 %v1789, 7
        %v1791 = vsub.s32 %v1788, %v1790
        %v1792 = vrot.slane %v1782, %v1791
        %v1794 = vunpack.c.l.s4 1966171168
        %v1795 = vunpack.c.0.s8 %v1794
        %v1796 = vlaneseq
        %v1797 = vshrl.u32 %v1796, 7
        %v1798 = vsub.s32 %v1795, %v1797
        %v1799 = vrot.slane %v1783, %v1798
        %v1801 = vunpack.c.l.s4 1966171168
        %v1802 = vunpack.c.0.s8 %v1801
        %v1803 = vlaneseq
        %v1804 = vshrl.u32 %v1803, 7
        %v1805 = vsub.s32 %v1802, %v1804
        %v1806 = vrot.slane %v1784, %v1805
        %v1808 = vunpack.c.l.s4 1966171168
        %v1809 = vunpack.c.0.s8 %v1808
        %v1810 = vlaneseq
        %v1811 = vshrl.u32 %v1810, 7
        %v1812 = vsub.s32 %v1809, %v1811
        %v1813 = vrot.slane %v1785, %v1812
        %v1814 = vcombine.low %v1792, %v1799
        %v1815 = vcombine.low %v1806, %v1813
        %v1817 = vunpack.c.l.s4 1966171168
        %v1818 = vunpack.c.0.s8 %v1817
        %v1819 = vlaneseq
        %v1820 = vshrl.u32 %v1819, 7
        %v1821 = vsub.s32 %v1818, %v1820
        %v1822 = vrot.slane %v1814, %v1821
        %v1824 = vunpack.c.l.s4 1966171168
        %v1825 = vunpack.c.0.s8 %v1824
        %v1826 = vlaneseq
        %v1827 = vshrl.u32 %v1826, 7
        %v1828 = vsub.s32 %v1825, %v1827
        %v1829 = vrot.slane %v1815, %v1828
        %v1830 = vcombine.low %v1822, %v1829
        %v1831 = vcombine.low %v674, %v678
        %v1832 = vcombine.low %v682, %v686
        %v1833 = vcombine.low %v690, %v694
        %v1834 = vcombine.low %v698, %v702
        %v1836 = vunpack.c.l.s4 1966171168
        %v1837 = vunpack.c.0.s8 %v1836
        %v1838 = vlaneseq
        %v1839 = vshrl.u32 %v1838, 7
        %v1840 = vsub.s32 %v1837, %v1839
        %v1841 = vrot.slane %v1831, %v1840
        %v1843 = vunpack.c.l.s4 1966171168
        %v1844 = vunpack.c.0.s8 %v1843
        %v1845 = vlaneseq
        %v1846 = vshrl.u32 %v1845, 7
        %v1847 = vsub.s32 %v1844, %v1846
        %v1848 = vrot.slane %v1832, %v1847
        %v1850 = vunpack.c.l.s4 1966171168
        %v1851 = vunpack.c.0.s8 %v1850
        %v1852 = vlaneseq
        %v1853 = vshrl.u32 %v1852, 7
        %v1854 = vsub.s32 %v1851, %v1853
        %v1855 = vrot.slane %v1833, %v1854
        %v1857 = vunpack.c.l.s4 1966171168
        %v1858 = vunpack.c.0.s8 %v1857
        %v1859 = vlaneseq
        %v1860 = vshrl.u32 %v1859, 7
        %v1861 = vsub.s32 %v1858, %v1860
        %v1862 = vrot.slane %v1834, %v1861
        %v1863 = vcombine.low %v1841, %v1848
        %v1864 = vcombine.low %v1855, %v1862
        %v1866 = vunpack.c.l.s4 1966171168
        %v1867 = vunpack.c.0.s8 %v1866
        %v1868 = vlaneseq
        %v1869 = vshrl.u32 %v1868, 7
        %v1870 = vsub.s32 %v1867, %v1869
        %v1871 = vrot.slane %v1863, %v1870
        %v1873 = vunpack.c.l.s4 1966171168
        %v1874 = vunpack.c.0.s8 %v1873
        %v1875 = vlaneseq
        %v1876 = vshrl.u32 %v1875, 7
        %v1877 = vsub.s32 %v1874, %v1876
        %v1878 = vrot.slane %v1864, %v1877
        %v1879 = vcombine.low %v1871, %v1878
        %v1880 = vcombine.low %v706, %v710
        %v1881 = vcombine.low %v714, %v718
        %v1882 = vcombine.low %v722, %v726
        %v1883 = vcombine.low %v730, %v734
        %v1885 = vunpack.c.l.s4 1966171168
        %v1886 = vunpack.c.0.s8 %v1885
        %v1887 = vlaneseq
        %v1888 = vshrl.u32 %v1887, 7
        %v1889 = vsub.s32 %v1886, %v1888
        %v1890 = vrot.slane %v1880, %v1889
        %v1892 = vunpack.c.l.s4 1966171168
        %v1893 = vunpack.c.0.s8 %v1892
        %v1894 = vlaneseq
        %v1895 = vshrl.u32 %v1894, 7
        %v1896 = vsub.s32 %v1893, %v1895
        %v1897 = vrot.slane %v1881, %v1896
        %v1899 = vunpack.c.l.s4 1966171168
        %v1900 = vunpack.c.0.s8 %v1899
        %v1901 = vlaneseq
        %v1902 = vshrl.u32 %v1901, 7
        %v1903 = vsub.s32 %v1900, %v1902
        %v1904 = vrot.slane %v1882, %v1903
        %v1906 = vunpack.c.l.s4 1966171168
        %v1907 = vunpack.c.0.s8 %v1906
        %v1908 = vlaneseq
        %v1909 = vshrl.u32 %v1908, 7
        %v1910 = vsub.s32 %v1907, %v1909
        %v1911 = vrot.slane %v1883, %v1910
        %v1912 = vcombine.low %v1890, %v1897
        %v1913 = vcombine.low %v1904, %v1911
        %v1915 = vunpack.c.l.s4 1966171168
        %v1916 = vunpack.c.0.s8 %v1915
        %v1917 = vlaneseq
        %v1918 = vshrl.u32 %v1917, 7
        %v1919 = vsub.s32 %v1916, %v1918
        %v1920 = vrot.slane %v1912, %v1919
        %v1922 = vunpack.c.l.s4 1966171168
        %v1923 = vunpack.c.0.s8 %v1922
        %v1924 = vlaneseq
        %v1925 = vshrl.u32 %v1924, 7
        %v1926 = vsub.s32 %v1923, %v1925
        %v1927 = vrot.slane %v1913, %v1926
        %v1928 = vcombine.low %v1920, %v1927
        %v1929 = vcombine.low %v738, %v742
        %v1930 = vcombine.low %v746, %v750
        %v1931 = vcombine.low %v754, %v758
        %v1932 = vcombine.low %v762, %v766
        %v1934 = vunpack.c.l.s4 1966171168
        %v1935 = vunpack.c.0.s8 %v1934
        %v1936 = vlaneseq
        %v1937 = vshrl.u32 %v1936, 7
        %v1938 = vsub.s32 %v1935, %v1937
        %v1939 = vrot.slane %v1929, %v1938
        %v1941 = vunpack.c.l.s4 1966171168
        %v1942 = vunpack.c.0.s8 %v1941
        %v1943 = vlaneseq
        %v1944 = vshrl.u32 %v1943, 7
        %v1945 = vsub.s32 %v1942, %v1944
        %v1946 = vrot.slane %v1930, %v1945
        %v1948 = vunpack.c.l.s4 1966171168
        %v1949 = vunpack.c.0.s8 %v1948
        %v1950 = vlaneseq
        %v1951 = vshrl.u32 %v1950, 7
        %v1952 = vsub.s32 %v1949, %v1951
        %v1953 = vrot.slane %v1931, %v1952
        %v1955 = vunpack.c.l.s4 1966171168
        %v1956 = vunpack.c.0.s8 %v1955
        %v1957 = vlaneseq
        %v1958 = vshrl.u32 %v1957, 7
        %v1959 = vsub.s32 %v1956, %v1958
        %v1960 = vrot.slane %v1932, %v1959
        %v1961 = vcombine.low %v1939, %v1946
        %v1962 = vcombine.low %v1953, %v1960
        %v1964 = vunpack.c.l.s4 1966171168
        %v1965 = vunpack.c.0.s8 %v1964
        %v1966 = vlaneseq
        %v1967 = vshrl.u32 %v1966, 7
        %v1968 = vsub.s32 %v1965, %v1967
        %v1969 = vrot.slane %v1961, %v1968
        %v1971 = vunpack.c.l.s4 1966171168
        %v1972 = vunpack.c.0.s8 %v1971
        %v1973 = vlaneseq
        %v1974 = vshrl.u32 %v1973, 7
        %v1975 = vsub.s32 %v1972, %v1974
        %v1976 = vrot.slane %v1962, %v1975
        %v1977 = vcombine.low %v1969, %v1976
        %v1978 = vcombine.low %v770, %v774
        %v1979 = vcombine.low %v778, %v782
        %v1980 = vcombine.low %v786, %v790
        %v1981 = vcombine.low %v794, %v798
        %v1983 = vunpack.c.l.s4 1966171168
        %v1984 = vunpack.c.0.s8 %v1983
        %v1985 = vlaneseq
        %v1986 = vshrl.u32 %v1985, 7
        %v1987 = vsub.s32 %v1984, %v1986
        %v1988 = vrot.slane %v1978, %v1987
        %v1990 = vunpack.c.l.s4 1966171168
        %v1991 = vunpack.c.0.s8 %v1990
        %v1992 = vlaneseq
        %v1993 = vshrl.u32 %v1992, 7
        %v1994 = vsub.s32 %v1991, %v1993
        %v1995 = vrot.slane %v1979, %v1994
        %v1997 = vunpack.c.l.s4 1966171168
        %v1998 = vunpack.c.0.s8 %v1997
        %v1999 = vlaneseq
        %v2000 = vshrl.u32 %v1999, 7
        %v2001 = vsub.s32 %v1998, %v2000
        %v2002 = vrot.slane %v1980, %v2001
        %v2004 = vunpack.c.l.s4 1966171168
        %v2005 = vunpack.c.0.s8 %v2004
        %v2006 = vlaneseq
        %v2007 = vshrl.u32 %v2006, 7
        %v2008 = vsub.s32 %v2005, %v2007
        %v2009 = vrot.slane %v1981, %v2008
        %v2010 = vcombine.low %v1988, %v1995
        %v2011 = vcombine.low %v2002, %v2009
        %v2013 = vunpack.c.l.s4 1966171168
        %v2014 = vunpack.c.0.s8 %v2013
        %v2015 = vlaneseq
        %v2016 = vshrl.u32 %v2015, 7
        %v2017 = vsub.s32 %v2014, %v2016
        %v2018 = vrot.slane %v2010, %v2017
        %v2020 = vunpack.c.l.s4 1966171168
        %v2021 = vunpack.c.0.s8 %v2020
        %v2022 = vlaneseq
        %v2023 = vshrl.u32 %v2022, 7
        %v2024 = vsub.s32 %v2021, %v2023
        %v2025 = vrot.slane %v2011, %v2024
        %v2026 = vcombine.low %v2018, %v2025
        %v2027 = vcombine.low %v802, %v806
        %v2028 = vcombine.low %v810, %v814
        %v2029 = vcombine.low %v818, %v822
        %v2030 = vcombine.low %v826, %v830
        %v2032 = vunpack.c.l.s4 1966171168
        %v2033 = vunpack.c.0.s8 %v2032
        %v2034 = vlaneseq
        %v2035 = vshrl.u32 %v2034, 7
        %v2036 = vsub.s32 %v2033, %v2035
        %v2037 = vrot.slane %v2027, %v2036
        %v2039 = vunpack.c.l.s4 1966171168
        %v2040 = vunpack.c.0.s8 %v2039
        %v2041 = vlaneseq
        %v2042 = vshrl.u32 %v2041, 7
        %v2043 = vsub.s32 %v2040, %v2042
        %v2044 = vrot.slane %v2028, %v2043
        %v2046 = vunpack.c.l.s4 1966171168
        %v2047 = vunpack.c.0.s8 %v2046
        %v2048 = vlaneseq
        %v2049 = vshrl.u32 %v2048, 7
        %v2050 = vsub.s32 %v2047, %v2049
        %v2051 = vrot.slane %v2029, %v2050
        %v2053 = vunpack.c.l.s4 1966171168
        %v2054 = vunpack.c.0.s8 %v2053
        %v2055 = vlaneseq
        %v2056 = vshrl.u32 %v2055, 7
        %v2057 = vsub.s32 %v2054, %v2056
        %v2058 = vrot.slane %v2030, %v2057
        %v2059 = vcombine.low %v2037, %v2044
        %v2060 = vcombine.low %v2051, %v2058
        %v2062 = vunpack.c.l.s4 1966171168
        %v2063 = vunpack.c.0.s8 %v2062
        %v2064 = vlaneseq
        %v2065 = vshrl.u32 %v2064, 7
        %v2066 = vsub.s32 %v2063, %v2065
        %v2067 = vrot.slane %v2059, %v2066
        %v2069 = vunpack.c.l.s4 1966171168
        %v2070 = vunpack.c.0.s8 %v2069
        %v2071 = vlaneseq
        %v2072 = vshrl.u32 %v2071, 7
        %v2073 = vsub.s32 %v2070, %v2072
        %v2074 = vrot.slane %v2060, %v2073
        %v2075 = vcombine.low %v2067, %v2074
        %v2076 = vcombine.low %v834, %v838
        %v2077 = vcombine.low %v842, %v846
        %v2078 = vcombine.low %v850, %v854
        %v2079 = vcombine.low %v858, %v862
        %v2081 = vunpack.c.l.s4 1966171168
        %v2082 = vunpack.c.0.s8 %v2081
        %v2083 = vlaneseq
        %v2084 = vshrl.u32 %v2083, 7
        %v2085 = vsub.s32 %v2082, %v2084
        %v2086 = vrot.slane %v2076, %v2085
        %v2088 = vunpack.c.l.s4 1966171168
        %v2089 = vunpack.c.0.s8 %v2088
        %v2090 = vlaneseq
        %v2091 = vshrl.u32 %v2090, 7
        %v2092 = vsub.s32 %v2089, %v2091
        %v2093 = vrot.slane %v2077, %v2092
        %v2095 = vunpack.c.l.s4 1966171168
        %v2096 = vunpack.c.0.s8 %v2095
        %v2097 = vlaneseq
        %v2098 = vshrl.u32 %v2097, 7
        %v2099 = vsub.s32 %v2096, %v2098
        %v2100 = vrot.slane %v2078, %v2099
        %v2102 = vunpack.c.l.s4 1966171168
        %v2103 = vunpack.c.0.s8 %v2102
        %v2104 = vlaneseq
        %v2105 = vshrl.u32 %v2104, 7
        %v2106 = vsub.s32 %v2103, %v2105
        %v2107 = vrot.slane %v2079, %v2106
        %v2108 = vcombine.low %v2086, %v2093
        %v2109 = vcombine.low %v2100, %v2107
        %v2111 = vunpack.c.l.s4 1966171168
        %v2112 = vunpack.c.0.s8 %v2111
        %v2113 = vlaneseq
        %v2114 = vshrl.u32 %v2113, 7
        %v2115 = vsub.s32 %v2112, %v2114
        %v2116 = vrot.slane %v2108, %v2115
        %v2118 = vunpack.c.l.s4 1966171168
        %v2119 = vunpack.c.0.s8 %v2118
        %v2120 = vlaneseq
        %v2121 = vshrl.u32 %v2120, 7
        %v2122 = vsub.s32 %v2119, %v2121
        %v2123 = vrot.slane %v2109, %v2122
        %v2124 = vcombine.low %v2116, %v2123
        %v2125 = vcombine.low %v866, %v870
        %v2126 = vcombine.low %v874, %v878
        %v2127 = vcombine.low %v882, %v886
        %v2128 = vcombine.low %v890, %v894
        %v2130 = vunpack.c.l.s4 1966171168
        %v2131 = vunpack.c.0.s8 %v2130
        %v2132 = vlaneseq
        %v2133 = vshrl.u32 %v2132, 7
        %v2134 = vsub.s32 %v2131, %v2133
        %v2135 = vrot.slane %v2125, %v2134
        %v2137 = vunpack.c.l.s4 1966171168
        %v2138 = vunpack.c.0.s8 %v2137
        %v2139 = vlaneseq
        %v2140 = vshrl.u32 %v2139, 7
        %v2141 = vsub.s32 %v2138, %v2140
        %v2142 = vrot.slane %v2126, %v2141
        %v2144 = vunpack.c.l.s4 1966171168
        %v2145 = vunpack.c.0.s8 %v2144
        %v2146 = vlaneseq
        %v2147 = vshrl.u32 %v2146, 7
        %v2148 = vsub.s32 %v2145, %v2147
        %v2149 = vrot.slane %v2127, %v2148
        %v2151 = vunpack.c.l.s4 1966171168
        %v2152 = vunpack.c.0.s8 %v2151
        %v2153 = vlaneseq
        %v2154 = vshrl.u32 %v2153, 7
        %v2155 = vsub.s32 %v2152, %v2154
        %v2156 = vrot.slane %v2128, %v2155
        %v2157 = vcombine.low %v2135, %v2142
        %v2158 = vcombine.low %v2149, %v2156
        %v2160 = vunpack.c.l.s4 1966171168
        %v2161 = vunpack.c.0.s8 %v2160
        %v2162 = vlaneseq
        %v2163 = vshrl.u32 %v2162, 7
        %v2164 = vsub.s32 %v2161, %v2163
        %v2165 = vrot.slane %v2157, %v2164
        %v2167 = vunpack.c.l.s4 1966171168
        %v2168 = vunpack.c.0.s8 %v2167
        %v2169 = vlaneseq
        %v2170 = vshrl.u32 %v2169, 7
        %v2171 = vsub.s32 %v2168, %v2170
        %v2172 = vrot.slane %v2158, %v2171
        %v2173 = vcombine.low %v2165, %v2172
        %v2174 = vcombine.low %v898, %v902
        %v2175 = vcombine.low %v906, %v910
        %v2176 = vcombine.low %v914, %v918
        %v2177 = vcombine.low %v922, %v926
        %v2179 = vunpack.c.l.s4 1966171168
        %v2180 = vunpack.c.0.s8 %v2179
        %v2181 = vlaneseq
        %v2182 = vshrl.u32 %v2181, 7
        %v2183 = vsub.s32 %v2180, %v2182
        %v2184 = vrot.slane %v2174, %v2183
        %v2186 = vunpack.c.l.s4 1966171168
        %v2187 = vunpack.c.0.s8 %v2186
        %v2188 = vlaneseq
        %v2189 = vshrl.u32 %v2188, 7
        %v2190 = vsub.s32 %v2187, %v2189
        %v2191 = vrot.slane %v2175, %v2190
        %v2193 = vunpack.c.l.s4 1966171168
        %v2194 = vunpack.c.0.s8 %v2193
        %v2195 = vlaneseq
        %v2196 = vshrl.u32 %v2195, 7
        %v2197 = vsub.s32 %v2194, %v2196
        %v2198 = vrot.slane %v2176, %v2197
        %v2200 = vunpack.c.l.s4 1966171168
        %v2201 = vunpack.c.0.s8 %v2200
        %v2202 = vlaneseq
        %v2203 = vshrl.u32 %v2202, 7
        %v2204 = vsub.s32 %v2201, %v2203
        %v2205 = vrot.slane %v2177, %v2204
        %v2206 = vcombine.low %v2184, %v2191
        %v2207 = vcombine.low %v2198, %v2205
        %v2209 = vunpack.c.l.s4 1966171168
        %v2210 = vunpack.c.0.s8 %v2209
        %v2211 = vlaneseq
        %v2212 = vshrl.u32 %v2211, 7
        %v2213 = vsub.s32 %v2210, %v2212
        %v2214 = vrot.slane %v2206, %v2213
        %v2216 = vunpack.c.l.s4 1966171168
        %v2217 = vunpack.c.0.s8 %v2216
        %v2218 = vlaneseq
        %v2219 = vshrl.u32 %v2218, 7
        %v2220 = vsub.s32 %v2217, %v2219
        %v2221 = vrot.slane %v2207, %v2220
        %v2222 = vcombine.low %v2214, %v2221
        %v2223 = vcombine.low %v930, %v934
        %v2224 = vcombine.low %v938, %v942
        %v2225 = vcombine.low %v946, %v950
        %v2226 = vcombine.low %v954, %v958
        %v2228 = vunpack.c.l.s4 1966171168
        %v2229 = vunpack.c.0.s8 %v2228
        %v2230 = vlaneseq
        %v2231 = vshrl.u32 %v2230, 7
        %v2232 = vsub.s32 %v2229, %v2231
        %v2233 = vrot.slane %v2223, %v2232
        %v2235 = vunpack.c.l.s4 1966171168
        %v2236 = vunpack.c.0.s8 %v2235
        %v2237 = vlaneseq
        %v2238 = vshrl.u32 %v2237, 7
        %v2239 = vsub.s32 %v2236, %v2238
        %v2240 = vrot.slane %v2224, %v2239
        %v2242 = vunpack.c.l.s4 1966171168
        %v2243 = vunpack.c.0.s8 %v2242
        %v2244 = vlaneseq
        %v2245 = vshrl.u32 %v2244, 7
        %v2246 = vsub.s32 %v2243, %v2245
        %v2247 = vrot.slane %v2225, %v2246
        %v2249 = vunpack.c.l.s4 1966171168
        %v2250 = vunpack.c.0.s8 %v2249
        %v2251 = vlaneseq
        %v2252 = vshrl.u32 %v2251, 7
        %v2253 = vsub.s32 %v2250, %v2252
        %v2254 = vrot.slane %v2226, %v2253
        %v2255 = vcombine.low %v2233, %v2240
        %v2256 = vcombine.low %v2247, %v2254
        %v2258 = vunpack.c.l.s4 1966171168
        %v2259 = vunpack.c.0.s8 %v2258
        %v2260 = vlaneseq
        %v2261 = vshrl.u32 %v2260, 7
        %v2262 = vsub.s32 %v2259, %v2261
        %v2263 = vrot.slane %v2255, %v2262
        %v2265 = vunpack.c.l.s4 1966171168
        %v2266 = vunpack.c.0.s8 %v2265
        %v2267 = vlaneseq
        %v2268 = vshrl.u32 %v2267, 7
        %v2269 = vsub.s32 %v2266, %v2268
        %v2270 = vrot.slane %v2256, %v2269
        %v2271 = vcombine.low %v2263, %v2270
        %v2272 = vcombine.low %v962, %v966
        %v2273 = vcombine.low %v970, %v974
        %v2274 = vcombine.low %v978, %v982
        %v2275 = vcombine.low %v986, %v990
        %v2277 = vunpack.c.l.s4 1966171168
        %v2278 = vunpack.c.0.s8 %v2277
        %v2279 = vlaneseq
        %v2280 = vshrl.u32 %v2279, 7
        %v2281 = vsub.s32 %v2278, %v2280
        %v2282 = vrot.slane %v2272, %v2281
        %v2284 = vunpack.c.l.s4 1966171168
        %v2285 = vunpack.c.0.s8 %v2284
        %v2286 = vlaneseq
        %v2287 = vshrl.u32 %v2286, 7
        %v2288 = vsub.s32 %v2285, %v2287
        %v2289 = vrot.slane %v2273, %v2288
        %v2291 = vunpack.c.l.s4 1966171168
        %v2292 = vunpack.c.0.s8 %v2291
        %v2293 = vlaneseq
        %v2294 = vshrl.u32 %v2293, 7
        %v2295 = vsub.s32 %v2292, %v2294
        %v2296 = vrot.slane %v2274, %v2295
        %v2298 = vunpack.c.l.s4 1966171168
        %v2299 = vunpack.c.0.s8 %v2298
        %v2300 = vlaneseq
        %v2301 = vshrl.u32 %v2300, 7
        %v2302 = vsub.s32 %v2299, %v2301
        %v2303 = vrot.slane %v2275, %v2302
        %v2304 = vcombine.low %v2282, %v2289
        %v2305 = vcombine.low %v2296, %v2303
        %v2307 = vunpack.c.l.s4 1966171168
        %v2308 = vunpack.c.0.s8 %v2307
        %v2309 = vlaneseq
        %v2310 = vshrl.u32 %v2309, 7
        %v2311 = vsub.s32 %v2308, %v2310
        %v2312 = vrot.slane %v2304, %v2311
        %v2314 = vunpack.c.l.s4 1966171168
        %v2315 = vunpack.c.0.s8 %v2314
        %v2316 = vlaneseq
        %v2317 = vshrl.u32 %v2316, 7
        %v2318 = vsub.s32 %v2315, %v2317
        %v2319 = vrot.slane %v2305, %v2318
        %v2320 = vcombine.low %v2312, %v2319
        %v2321 = vcombine.low %v994, %v998
        %v2322 = vcombine.low %v1002, %v1006
        %v2323 = vcombine.low %v1010, %v1014
        %v2324 = vcombine.low %v1018, %v1022
        %v2326 = vunpack.c.l.s4 1966171168
        %v2327 = vunpack.c.0.s8 %v2326
        %v2328 = vlaneseq
        %v2329 = vshrl.u32 %v2328, 7
        %v2330 = vsub.s32 %v2327, %v2329
        %v2331 = vrot.slane %v2321, %v2330
        %v2333 = vunpack.c.l.s4 1966171168
        %v2334 = vunpack.c.0.s8 %v2333
        %v2335 = vlaneseq
        %v2336 = vshrl.u32 %v2335, 7
        %v2337 = vsub.s32 %v2334, %v2336
        %v2338 = vrot.slane %v2322, %v2337
        %v2340 = vunpack.c.l.s4 1966171168
        %v2341 = vunpack.c.0.s8 %v2340
        %v2342 = vlaneseq
        %v2343 = vshrl.u32 %v2342, 7
        %v2344 = vsub.s32 %v2341, %v2343
        %v2345 = vrot.slane %v2323, %v2344
        %v2347 = vunpack.c.l.s4 1966171168
        %v2348 = vunpack.c.0.s8 %v2347
        %v2349 = vlaneseq
        %v2350 = vshrl.u32 %v2349, 7
        %v2351 = vsub.s32 %v2348, %v2350
        %v2352 = vrot.slane %v2324, %v2351
        %v2353 = vcombine.low %v2331, %v2338
        %v2354 = vcombine.low %v2345, %v2352
        %v2356 = vunpack.c.l.s4 1966171168
        %v2357 = vunpack.c.0.s8 %v2356
        %v2358 = vlaneseq
        %v2359 = vshrl.u32 %v2358, 7
        %v2360 = vsub.s32 %v2357, %v2359
        %v2361 = vrot.slane %v2353, %v2360
        %v2363 = vunpack.c.l.s4 1966171168
        %v2364 = vunpack.c.0.s8 %v2363
        %v2365 = vlaneseq
        %v2366 = vshrl.u32 %v2365, 7
        %v2367 = vsub.s32 %v2364, %v2366
        %v2368 = vrot.slane %v2354, %v2367
        %v2369 = vcombine.low %v2361, %v2368
        %v2370 = vcombine.low %v1026, %v1030
        %v2371 = vcombine.low %v1034, %v1038
        %v2372 = vcombine.low %v1042, %v1046
        %v2373 = vcombine.low %v1050, %v1054
        %v2375 = vunpack.c.l.s4 1966171168
        %v2376 = vunpack.c.0.s8 %v2375
        %v2377 = vlaneseq
        %v2378 = vshrl.u32 %v2377, 7
        %v2379 = vsub.s32 %v2376, %v2378
        %v2380 = vrot.slane %v2370, %v2379
        %v2382 = vunpack.c.l.s4 1966171168
        %v2383 = vunpack.c.0.s8 %v2382
        %v2384 = vlaneseq
        %v2385 = vshrl.u32 %v2384, 7
        %v2386 = vsub.s32 %v2383, %v2385
        %v2387 = vrot.slane %v2371, %v2386
        %v2389 = vunpack.c.l.s4 1966171168
        %v2390 = vunpack.c.0.s8 %v2389
        %v2391 = vlaneseq
        %v2392 = vshrl.u32 %v2391, 7
        %v2393 = vsub.s32 %v2390, %v2392
        %v2394 = vrot.slane %v2372, %v2393
        %v2396 = vunpack.c.l.s4 1966171168
        %v2397 = vunpack.c.0.s8 %v2396
        %v2398 = vlaneseq
        %v2399 = vshrl.u32 %v2398, 7
        %v2400 = vsub.s32 %v2397, %v2399
        %v2401 = vrot.slane %v2373, %v2400
        %v2402 = vcombine.low %v2380, %v2387
        %v2403 = vcombine.low %v2394, %v2401
        %v2405 = vunpack.c.l.s4 1966171168
        %v2406 = vunpack.c.0.s8 %v2405
        %v2407 = vlaneseq
        %v2408 = vshrl.u32 %v2407, 7
        %v2409 = vsub.s32 %v2406, %v2408
        %v2410 = vrot.slane %v2402, %v2409
        %v2412 = vunpack.c.l.s4 1966171168
        %v2413 = vunpack.c.0.s8 %v2412
        %v2414 = vlaneseq
        %v2415 = vshrl.u32 %v2414, 7
        %v2416 = vsub.s32 %v2413, %v2415
        %v2417 = vrot.slane %v2403, %v2416
        %v2418 = vcombine.low %v2410, %v2417
        %v2419 = vcombine.low %v1058, %v1062
        %v2420 = vcombine.low %v1066, %v1070
        %v2421 = vcombine.low %v1074, %v1078
        %v2422 = vcombine.low %v1082, %v1086
        %v2424 = vunpack.c.l.s4 1966171168
        %v2425 = vunpack.c.0.s8 %v2424
        %v2426 = vlaneseq
        %v2427 = vshrl.u32 %v2426, 7
        %v2428 = vsub.s32 %v2425, %v2427
        %v2429 = vrot.slane %v2419, %v2428
        %v2431 = vunpack.c.l.s4 1966171168
        %v2432 = vunpack.c.0.s8 %v2431
        %v2433 = vlaneseq
        %v2434 = vshrl.u32 %v2433, 7
        %v2435 = vsub.s32 %v2432, %v2434
        %v2436 = vrot.slane %v2420, %v2435
        %v2438 = vunpack.c.l.s4 1966171168
        %v2439 = vunpack.c.0.s8 %v2438
        %v2440 = vlaneseq
        %v2441 = vshrl.u32 %v2440, 7
        %v2442 = vsub.s32 %v2439, %v2441
        %v2443 = vrot.slane %v2421, %v2442
        %v2445 = vunpack.c.l.s4 1966171168
        %v2446 = vunpack.c.0.s8 %v2445
        %v2447 = vlaneseq
        %v2448 = vshrl.u32 %v2447, 7
        %v2449 = vsub.s32 %v2446, %v2448
        %v2450 = vrot.slane %v2422, %v2449
        %v2451 = vcombine.low %v2429, %v2436
        %v2452 = vcombine.low %v2443, %v2450
        %v2454 = vunpack.c.l.s4 1966171168
        %v2455 = vunpack.c.0.s8 %v2454
        %v2456 = vlaneseq
        %v2457 = vshrl.u32 %v2456, 7
        %v2458 = vsub.s32 %v2455, %v2457
        %v2459 = vrot.slane %v2451, %v2458
        %v2461 = vunpack.c.l.s4 1966171168
        %v2462 = vunpack.c.0.s8 %v2461
        %v2463 = vlaneseq
        %v2464 = vshrl.u32 %v2463, 7
        %v2465 = vsub.s32 %v2462, %v2464
        %v2466 = vrot.slane %v2452, %v2465
        %v2467 = vcombine.low %v2459, %v2466
        %v2468 = vcombine.low %v1090, %v1094
        %v2469 = vcombine.low %v1098, %v1102
        %v2470 = vcombine.low %v1106, %v1110
        %v2471 = vcombine.low %v1114, %v1118
        %v2473 = vunpack.c.l.s4 1966171168
        %v2474 = vunpack.c.0.s8 %v2473
        %v2475 = vlaneseq
        %v2476 = vshrl.u32 %v2475, 7
        %v2477 = vsub.s32 %v2474, %v2476
        %v2478 = vrot.slane %v2468, %v2477
        %v2480 = vunpack.c.l.s4 1966171168
        %v2481 = vunpack.c.0.s8 %v2480
        %v2482 = vlaneseq
        %v2483 = vshrl.u32 %v2482, 7
        %v2484 = vsub.s32 %v2481, %v2483
        %v2485 = vrot.slane %v2469, %v2484
        %v2487 = vunpack.c.l.s4 1966171168
        %v2488 = vunpack.c.0.s8 %v2487
        %v2489 = vlaneseq
        %v2490 = vshrl.u32 %v2489, 7
        %v2491 = vsub.s32 %v2488, %v2490
        %v2492 = vrot.slane %v2470, %v2491
        %v2494 = vunpack.c.l.s4 1966171168
        %v2495 = vunpack.c.0.s8 %v2494
        %v2496 = vlaneseq
        %v2497 = vshrl.u32 %v2496, 7
        %v2498 = vsub.s32 %v2495, %v2497
        %v2499 = vrot.slane %v2471, %v2498
        %v2500 = vcombine.low %v2478, %v2485
        %v2501 = vcombine.low %v2492, %v2499
        %v2503 = vunpack.c.l.s4 1966171168
        %v2504 = vunpack.c.0.s8 %v2503
        %v2505 = vlaneseq
        %v2506 = vshrl.u32 %v2505, 7
        %v2507 = vsub.s32 %v2504, %v2506
        %v2508 = vrot.slane %v2500, %v2507
        %v2510 = vunpack.c.l.s4 1966171168
        %v2511 = vunpack.c.0.s8 %v2510
        %v2512 = vlaneseq
        %v2513 = vshrl.u32 %v2512, 7
        %v2514 = vsub.s32 %v2511, %v2513
        %v2515 = vrot.slane %v2501, %v2514
        %v2516 = vcombine.low %v2508, %v2515
        %v2517 = vcombine.low %v1122, %v1126
        %v2518 = vcombine.low %v1130, %v1134
        %v2519 = vcombine.low %v1138, %v1142
        %v2520 = vcombine.low %v1146, %v1150
        %v2522 = vunpack.c.l.s4 1966171168
        %v2523 = vunpack.c.0.s8 %v2522
        %v2524 = vlaneseq
        %v2525 = vshrl.u32 %v2524, 7
        %v2526 = vsub.s32 %v2523, %v2525
        %v2527 = vrot.slane %v2517, %v2526
        %v2529 = vunpack.c.l.s4 1966171168
        %v2530 = vunpack.c.0.s8 %v2529
        %v2531 = vlaneseq
        %v2532 = vshrl.u32 %v2531, 7
        %v2533 = vsub.s32 %v2530, %v2532
        %v2534 = vrot.slane %v2518, %v2533
        %v2536 = vunpack.c.l.s4 1966171168
        %v2537 = vunpack.c.0.s8 %v2536
        %v2538 = vlaneseq
        %v2539 = vshrl.u32 %v2538, 7
        %v2540 = vsub.s32 %v2537, %v2539
        %v2541 = vrot.slane %v2519, %v2540
        %v2543 = vunpack.c.l.s4 1966171168
        %v2544 = vunpack.c.0.s8 %v2543
        %v2545 = vlaneseq
        %v2546 = vshrl.u32 %v2545, 7
        %v2547 = vsub.s32 %v2544, %v2546
        %v2548 = vrot.slane %v2520, %v2547
        %v2549 = vcombine.low %v2527, %v2534
        %v2550 = vcombine.low %v2541, %v2548
        %v2552 = vunpack.c.l.s4 1966171168
        %v2553 = vunpack.c.0.s8 %v2552
        %v2554 = vlaneseq
        %v2555 = vshrl.u32 %v2554, 7
        %v2556 = vsub.s32 %v2553, %v2555
        %v2557 = vrot.slane %v2549, %v2556
        %v2559 = vunpack.c.l.s4 1966171168
        %v2560 = vunpack.c.0.s8 %v2559
        %v2561 = vlaneseq
        %v2562 = vshrl.u32 %v2561, 7
        %v2563 = vsub.s32 %v2560, %v2562
        %v2564 = vrot.slane %v2550, %v2563
        %v2565 = vcombine.low %v2557, %v2564
        %v2566 = vcombine.low %v1154, %v1158
        %v2567 = vcombine.low %v1162, %v1166
        %v2568 = vcombine.low %v1170, %v1174
        %v2569 = vcombine.low %v1178, %v1182
        %v2571 = vunpack.c.l.s4 1966171168
        %v2572 = vunpack.c.0.s8 %v2571
        %v2573 = vlaneseq
        %v2574 = vshrl.u32 %v2573, 7
        %v2575 = vsub.s32 %v2572, %v2574
        %v2576 = vrot.slane %v2566, %v2575
        %v2578 = vunpack.c.l.s4 1966171168
        %v2579 = vunpack.c.0.s8 %v2578
        %v2580 = vlaneseq
        %v2581 = vshrl.u32 %v2580, 7
        %v2582 = vsub.s32 %v2579, %v2581
        %v2583 = vrot.slane %v2567, %v2582
        %v2585 = vunpack.c.l.s4 1966171168
        %v2586 = vunpack.c.0.s8 %v2585
        %v2587 = vlaneseq
        %v2588 = vshrl.u32 %v2587, 7
        %v2589 = vsub.s32 %v2586, %v2588
        %v2590 = vrot.slane %v2568, %v2589
        %v2592 = vunpack.c.l.s4 1966171168
        %v2593 = vunpack.c.0.s8 %v2592
        %v2594 = vlaneseq
        %v2595 = vshrl.u32 %v2594, 7
        %v2596 = vsub.s32 %v2593, %v2595
        %v2597 = vrot.slane %v2569, %v2596
        %v2598 = vcombine.low %v2576, %v2583
        %v2599 = vcombine.low %v2590, %v2597
        %v2601 = vunpack.c.l.s4 1966171168
        %v2602 = vunpack.c.0.s8 %v2601
        %v2603 = vlaneseq
        %v2604 = vshrl.u32 %v2603, 7
        %v2605 = vsub.s32 %v2602, %v2604
        %v2606 = vrot.slane %v2598, %v2605
        %v2608 = vunpack.c.l.s4 1966171168
        %v2609 = vunpack.c.0.s8 %v2608
        %v2610 = vlaneseq
        %v2611 = vshrl.u32 %v2610, 7
        %v2612 = vsub.s32 %v2609, %v2611
        %v2613 = vrot.slane %v2599, %v2612
        %v2614 = vcombine.low %v2606, %v2613
        %v2615 = vcombine.low %v1186, %v1190
        %v2616 = vcombine.low %v1194, %v1198
        %v2617 = vcombine.low %v1202, %v1206
        %v2618 = vcombine.low %v1210, %v1214
        %v2620 = vunpack.c.l.s4 1966171168
        %v2621 = vunpack.c.0.s8 %v2620
        %v2622 = vlaneseq
        %v2623 = vshrl.u32 %v2622, 7
        %v2624 = vsub.s32 %v2621, %v2623
        %v2625 = vrot.slane %v2615, %v2624
        %v2627 = vunpack.c.l.s4 1966171168
        %v2628 = vunpack.c.0.s8 %v2627
        %v2629 = vlaneseq
        %v2630 = vshrl.u32 %v2629, 7
        %v2631 = vsub.s32 %v2628, %v2630
        %v2632 = vrot.slane %v2616, %v2631
        %v2634 = vunpack.c.l.s4 1966171168
        %v2635 = vunpack.c.0.s8 %v2634
        %v2636 = vlaneseq
        %v2637 = vshrl.u32 %v2636, 7
        %v2638 = vsub.s32 %v2635, %v2637
        %v2639 = vrot.slane %v2617, %v2638
        %v2641 = vunpack.c.l.s4 1966171168
        %v2642 = vunpack.c.0.s8 %v2641
        %v2643 = vlaneseq
        %v2644 = vshrl.u32 %v2643, 7
        %v2645 = vsub.s32 %v2642, %v2644
        %v2646 = vrot.slane %v2618, %v2645
        %v2647 = vcombine.low %v2625, %v2632
        %v2648 = vcombine.low %v2639, %v2646
        %v2650 = vunpack.c.l.s4 1966171168
        %v2651 = vunpack.c.0.s8 %v2650
        %v2652 = vlaneseq
        %v2653 = vshrl.u32 %v2652, 7
        %v2654 = vsub.s32 %v2651, %v2653
        %v2655 = vrot.slane %v2647, %v2654
        %v2657 = vunpack.c.l.s4 1966171168
        %v2658 = vunpack.c.0.s8 %v2657
        %v2659 = vlaneseq
        %v2660 = vshrl.u32 %v2659, 7
        %v2661 = vsub.s32 %v2658, %v2660
        %v2662 = vrot.slane %v2648, %v2661
        %v2663 = vcombine.low %v2655, %v2662
        %v2664 = vcombine.low %v1218, %v1222
        %v2665 = vcombine.low %v1226, %v1230
        %v2666 = vcombine.low %v1234, %v1238
        %v2667 = vcombine.low %v1242, %v1246
        %v2669 = vunpack.c.l.s4 1966171168
        %v2670 = vunpack.c.0.s8 %v2669
        %v2671 = vlaneseq
        %v2672 = vshrl.u32 %v2671, 7
        %v2673 = vsub.s32 %v2670, %v2672
        %v2674 = vrot.slane %v2664, %v2673
        %v2676 = vunpack.c.l.s4 1966171168
        %v2677 = vunpack.c.0.s8 %v2676
        %v2678 = vlaneseq
        %v2679 = vshrl.u32 %v2678, 7
        %v2680 = vsub.s32 %v2677, %v2679
        %v2681 = vrot.slane %v2665, %v2680
        %v2683 = vunpack.c.l.s4 1966171168
        %v2684 = vunpack.c.0.s8 %v2683
        %v2685 = vlaneseq
        %v2686 = vshrl.u32 %v2685, 7
        %v2687 = vsub.s32 %v2684, %v2686
        %v2688 = vrot.slane %v2666, %v2687
        %v2690 = vunpack.c.l.s4 1966171168
        %v2691 = vunpack.c.0.s8 %v2690
        %v2692 = vlaneseq
        %v2693 = vshrl.u32 %v2692, 7
        %v2694 = vsub.s32 %v2691, %v2693
        %v2695 = vrot.slane %v2667, %v2694
        %v2696 = vcombine.low %v2674, %v2681
        %v2697 = vcombine.low %v2688, %v2695
        %v2699 = vunpack.c.l.s4 1966171168
        %v2700 = vunpack.c.0.s8 %v2699
        %v2701 = vlaneseq
        %v2702 = vshrl.u32 %v2701, 7
        %v2703 = vsub.s32 %v2700, %v2702
        %v2704 = vrot.slane %v2696, %v2703
        %v2706 = vunpack.c.l.s4 1966171168
        %v2707 = vunpack.c.0.s8 %v2706
        %v2708 = vlaneseq
        %v2709 = vshrl.u32 %v2708, 7
        %v2710 = vsub.s32 %v2707, %v2709
        %v2711 = vrot.slane %v2697, %v2710
        %v2712 = vcombine.low %v2704, %v2711
        %v2713 = vcombine.low %v1250, %v1254
        %v2714 = vcombine.low %v1258, %v1262
        %v2715 = vcombine.low %v1266, %v1270
        %v2716 = vcombine.low %v1274, %v1278
        %v2718 = vunpack.c.l.s4 1966171168
        %v2719 = vunpack.c.0.s8 %v2718
        %v2720 = vlaneseq
        %v2721 = vshrl.u32 %v2720, 7
        %v2722 = vsub.s32 %v2719, %v2721
        %v2723 = vrot.slane %v2713, %v2722
        %v2725 = vunpack.c.l.s4 1966171168
        %v2726 = vunpack.c.0.s8 %v2725
        %v2727 = vlaneseq
        %v2728 = vshrl.u32 %v2727, 7
        %v2729 = vsub.s32 %v2726, %v2728
        %v2730 = vrot.slane %v2714, %v2729
        %v2732 = vunpack.c.l.s4 1966171168
        %v2733 = vunpack.c.0.s8 %v2732
        %v2734 = vlaneseq
        %v2735 = vshrl.u32 %v2734, 7
        %v2736 = vsub.s32 %v2733, %v2735
        %v2737 = vrot.slane %v2715, %v2736
        %v2739 = vunpack.c.l.s4 1966171168
        %v2740 = vunpack.c.0.s8 %v2739
        %v2741 = vlaneseq
        %v2742 = vshrl.u32 %v2741, 7
        %v2743 = vsub.s32 %v2740, %v2742
        %v2744 = vrot.slane %v2716, %v2743
        %v2745 = vcombine.low %v2723, %v2730
        %v2746 = vcombine.low %v2737, %v2744
        %v2748 = vunpack.c.l.s4 1966171168
        %v2749 = vunpack.c.0.s8 %v2748
        %v2750 = vlaneseq
        %v2751 = vshrl.u32 %v2750, 7
        %v2752 = vsub.s32 %v2749, %v2751
        %v2753 = vrot.slane %v2745, %v2752
        %v2755 = vunpack.c.l.s4 1966171168
        %v2756 = vunpack.c.0.s8 %v2755
        %v2757 = vlaneseq
        %v2758 = vshrl.u32 %v2757, 7
        %v2759 = vsub.s32 %v2756, %v2758
        %v2760 = vrot.slane %v2746, %v2759
        %v2761 = vcombine.low %v2753, %v2760
        %v2762 = vcombine.low %v1282, %v1286
        %v2763 = vcombine.low %v1290, %v1294
        %v2764 = vcombine.low %v1298, %v1302
        %v2765 = vcombine.low %v1306, %v1310
        %v2767 = vunpack.c.l.s4 1966171168
        %v2768 = vunpack.c.0.s8 %v2767
        %v2769 = vlaneseq
        %v2770 = vshrl.u32 %v2769, 7
        %v2771 = vsub.s32 %v2768, %v2770
        %v2772 = vrot.slane %v2762, %v2771
        %v2774 = vunpack.c.l.s4 1966171168
        %v2775 = vunpack.c.0.s8 %v2774
        %v2776 = vlaneseq
        %v2777 = vshrl.u32 %v2776, 7
        %v2778 = vsub.s32 %v2775, %v2777
        %v2779 = vrot.slane %v2763, %v2778
        %v2781 = vunpack.c.l.s4 1966171168
        %v2782 = vunpack.c.0.s8 %v2781
        %v2783 = vlaneseq
        %v2784 = vshrl.u32 %v2783, 7
        %v2785 = vsub.s32 %v2782, %v2784
        %v2786 = vrot.slane %v2764, %v2785
        %v2788 = vunpack.c.l.s4 1966171168
        %v2789 = vunpack.c.0.s8 %v2788
        %v2790 = vlaneseq
        %v2791 = vshrl.u32 %v2790, 7
        %v2792 = vsub.s32 %v2789, %v2791
        %v2793 = vrot.slane %v2765, %v2792
        %v2794 = vcombine.low %v2772, %v2779
        %v2795 = vcombine.low %v2786, %v2793
        %v2797 = vunpack.c.l.s4 1966171168
        %v2798 = vunpack.c.0.s8 %v2797
        %v2799 = vlaneseq
        %v2800 = vshrl.u32 %v2799, 7
        %v2801 = vsub.s32 %v2798, %v2800
        %v2802 = vrot.slane %v2794, %v2801
        %v2804 = vunpack.c.l.s4 1966171168
        %v2805 = vunpack.c.0.s8 %v2804
        %v2806 = vlaneseq
        %v2807 = vshrl.u32 %v2806, 7
        %v2808 = vsub.s32 %v2805, %v2807
        %v2809 = vrot.slane %v2795, %v2808
        %v2810 = vcombine.low %v2802, %v2809
        %v2811 = vcombine.low %v1314, %v1318
        %v2812 = vcombine.low %v1322, %v1326
        %v2813 = vcombine.low %v1330, %v1334
        %v2814 = vcombine.low %v1338, %v1342
        %v2816 = vunpack.c.l.s4 1966171168
        %v2817 = vunpack.c.0.s8 %v2816
        %v2818 = vlaneseq
        %v2819 = vshrl.u32 %v2818, 7
        %v2820 = vsub.s32 %v2817, %v2819
        %v2821 = vrot.slane %v2811, %v2820
        %v2823 = vunpack.c.l.s4 1966171168
        %v2824 = vunpack.c.0.s8 %v2823
        %v2825 = vlaneseq
        %v2826 = vshrl.u32 %v2825, 7
        %v2827 = vsub.s32 %v2824, %v2826
        %v2828 = vrot.slane %v2812, %v2827
        %v2830 = vunpack.c.l.s4 1966171168
        %v2831 = vunpack.c.0.s8 %v2830
        %v2832 = vlaneseq
        %v2833 = vshrl.u32 %v2832, 7
        %v2834 = vsub.s32 %v2831, %v2833
        %v2835 = vrot.slane %v2813, %v2834
        %v2837 = vunpack.c.l.s4 1966171168
        %v2838 = vunpack.c.0.s8 %v2837
        %v2839 = vlaneseq
        %v2840 = vshrl.u32 %v2839, 7
        %v2841 = vsub.s32 %v2838, %v2840
        %v2842 = vrot.slane %v2814, %v2841
        %v2843 = vcombine.low %v2821, %v2828
        %v2844 = vcombine.low %v2835, %v2842
        %v2846 = vunpack.c.l.s4 1966171168
        %v2847 = vunpack.c.0.s8 %v2846
        %v2848 = vlaneseq
        %v2849 = vshrl.u32 %v2848, 7
        %v2850 = vsub.s32 %v2847, %v2849
        %v2851 = vrot.slane %v2843, %v2850
        %v2853 = vunpack.c.l.s4 1966171168
        %v2854 = vunpack.c.0.s8 %v2853
        %v2855 = vlaneseq
        %v2856 = vshrl.u32 %v2855, 7
        %v2857 = vsub.s32 %v2854, %v2856
        %v2858 = vrot.slane %v2844, %v2857
        %v2859 = vcombine.low %v2851, %v2858
        %v2860 = vcombine.low %v1346, %v1350
        %v2861 = vcombine.low %v1354, %v1358
        %v2862 = vcombine.low %v1362, %v1366
        %v2863 = vcombine.low %v1370, %v1374
        %v2865 = vunpack.c.l.s4 1966171168
        %v2866 = vunpack.c.0.s8 %v2865
        %v2867 = vlaneseq
        %v2868 = vshrl.u32 %v2867, 7
        %v2869 = vsub.s32 %v2866, %v2868
        %v2870 = vrot.slane %v2860, %v2869
        %v2872 = vunpack.c.l.s4 1966171168
        %v2873 = vunpack.c.0.s8 %v2872
        %v2874 = vlaneseq
        %v2875 = vshrl.u32 %v2874, 7
        %v2876 = vsub.s32 %v2873, %v2875
        %v2877 = vrot.slane %v2861, %v2876
        %v2879 = vunpack.c.l.s4 1966171168
        %v2880 = vunpack.c.0.s8 %v2879
        %v2881 = vlaneseq
        %v2882 = vshrl.u32 %v2881, 7
        %v2883 = vsub.s32 %v2880, %v2882
        %v2884 = vrot.slane %v2862, %v2883
        %v2886 = vunpack.c.l.s4 1966171168
        %v2887 = vunpack.c.0.s8 %v2886
        %v2888 = vlaneseq
        %v2889 = vshrl.u32 %v2888, 7
        %v2890 = vsub.s32 %v2887, %v2889
        %v2891 = vrot.slane %v2863, %v2890
        %v2892 = vcombine.low %v2870, %v2877
        %v2893 = vcombine.low %v2884, %v2891
        %v2895 = vunpack.c.l.s4 1966171168
        %v2896 = vunpack.c.0.s8 %v2895
        %v2897 = vlaneseq
        %v2898 = vshrl.u32 %v2897, 7
        %v2899 = vsub.s32 %v2896, %v2898
        %v2900 = vrot.slane %v2892, %v2899
        %v2902 = vunpack.c.l.s4 1966171168
        %v2903 = vunpack.c.0.s8 %v2902
        %v2904 = vlaneseq
        %v2905 = vshrl.u32 %v2904, 7
        %v2906 = vsub.s32 %v2903, %v2905
        %v2907 = vrot.slane %v2893, %v2906
        %v2908 = vcombine.low %v2900, %v2907
        %v2909 = vcombine.low %v1378, %v1382
        %v2910 = vcombine.low %v1386, %v1390
        %v2911 = vcombine.low %v1394, %v1398
        %v2912 = vcombine.low %v1402, %v1406
        %v2914 = vunpack.c.l.s4 1966171168
        %v2915 = vunpack.c.0.s8 %v2914
        %v2916 = vlaneseq
        %v2917 = vshrl.u32 %v2916, 7
        %v2918 = vsub.s32 %v2915, %v2917
        %v2919 = vrot.slane %v2909, %v2918
        %v2921 = vunpack.c.l.s4 1966171168
        %v2922 = vunpack.c.0.s8 %v2921
        %v2923 = vlaneseq
        %v2924 = vshrl.u32 %v2923, 7
        %v2925 = vsub.s32 %v2922, %v2924
        %v2926 = vrot.slane %v2910, %v2925
        %v2928 = vunpack.c.l.s4 1966171168
        %v2929 = vunpack.c.0.s8 %v2928
        %v2930 = vlaneseq
        %v2931 = vshrl.u32 %v2930, 7
        %v2932 = vsub.s32 %v2929, %v2931
        %v2933 = vrot.slane %v2911, %v2932
        %v2935 = vunpack.c.l.s4 1966171168
        %v2936 = vunpack.c.0.s8 %v2935
        %v2937 = vlaneseq
        %v2938 = vshrl.u32 %v2937, 7
        %v2939 = vsub.s32 %v2936, %v2938
        %v2940 = vrot.slane %v2912, %v2939
        %v2941 = vcombine.low %v2919, %v2926
        %v2942 = vcombine.low %v2933, %v2940
        %v2944 = vunpack.c.l.s4 1966171168
        %v2945 = vunpack.c.0.s8 %v2944
        %v2946 = vlaneseq
        %v2947 = vshrl.u32 %v2946, 7
        %v2948 = vsub.s32 %v2945, %v2947
        %v2949 = vrot.slane %v2941, %v2948
        %v2951 = vunpack.c.l.s4 1966171168
        %v2952 = vunpack.c.0.s8 %v2951
        %v2953 = vlaneseq
        %v2954 = vshrl.u32 %v2953, 7
        %v2955 = vsub.s32 %v2952, %v2954
        %v2956 = vrot.slane %v2942, %v2955
        %v2957 = vcombine.low %v2949, %v2956
        %v2958 = vcombine.low %v1410, %v1414
        %v2959 = vcombine.low %v1418, %v1422
        %v2960 = vcombine.low %v1426, %v1430
        %v2961 = vcombine.low %v1434, %v1438
        %v2963 = vunpack.c.l.s4 1966171168
        %v2964 = vunpack.c.0.s8 %v2963
        %v2965 = vlaneseq
        %v2966 = vshrl.u32 %v2965, 7
        %v2967 = vsub.s32 %v2964, %v2966
        %v2968 = vrot.slane %v2958, %v2967
        %v2970 = vunpack.c.l.s4 1966171168
        %v2971 = vunpack.c.0.s8 %v2970
        %v2972 = vlaneseq
        %v2973 = vshrl.u32 %v2972, 7
        %v2974 = vsub.s32 %v2971, %v2973
        %v2975 = vrot.slane %v2959, %v2974
        %v2977 = vunpack.c.l.s4 1966171168
        %v2978 = vunpack.c.0.s8 %v2977
        %v2979 = vlaneseq
        %v2980 = vshrl.u32 %v2979, 7
        %v2981 = vsub.s32 %v2978, %v2980
        %v2982 = vrot.slane %v2960, %v2981
        %v2984 = vunpack.c.l.s4 1966171168
        %v2985 = vunpack.c.0.s8 %v2984
        %v2986 = vlaneseq
        %v2987 = vshrl.u32 %v2986, 7
        %v2988 = vsub.s32 %v2985, %v2987
        %v2989 = vrot.slane %v2961, %v2988
        %v2990 = vcombine.low %v2968, %v2975
        %v2991 = vcombine.low %v2982, %v2989
        %v2993 = vunpack.c.l.s4 1966171168
        %v2994 = vunpack.c.0.s8 %v2993
        %v2995 = vlaneseq
        %v2996 = vshrl.u32 %v2995, 7
        %v2997 = vsub.s32 %v2994, %v2996
        %v2998 = vrot.slane %v2990, %v2997
        %v3000 = vunpack.c.l.s4 1966171168
        %v3001 = vunpack.c.0.s8 %v3000
        %v3002 = vlaneseq
        %v3003 = vshrl.u32 %v3002, 7
        %v3004 = vsub.s32 %v3001, %v3003
        %v3005 = vrot.slane %v2991, %v3004
        %v3006 = vcombine.low %v2998, %v3005
        %3007 = vset.pattern.permute.xlu0 0
        %3008 = vperm.xlu0 %3007, %v1487
        %v3009 = vpop.permute.xlu0 %3008
        %3010 = vset.pattern.permute.xlu0 0
        %3011 = vperm.xlu0 %3010, %v1536
        %v3012 = vpop.permute.xlu0 %3011
        %3013 = vset.pattern.permute.xlu0 0
        %3014 = vperm.xlu0 %3013, %v1585
        %v3015 = vpop.permute.xlu0 %3014
        %3016 = vset.pattern.permute.xlu0 0
        %3017 = vperm.xlu0 %3016, %v1634
        %v3018 = vpop.permute.xlu0 %3017
        %3019 = vset.pattern.permute.xlu0 0
        %3020 = vperm.xlu0 %3019, %v1683
        %v3021 = vpop.permute.xlu0 %3020
        %3022 = vset.pattern.permute.xlu0 0
        %3023 = vperm.xlu0 %3022, %v1732
        %v3024 = vpop.permute.xlu0 %3023
        %3025 = vset.pattern.permute.xlu0 0
        %3026 = vperm.xlu0 %3025, %v1781
        %v3027 = vpop.permute.xlu0 %3026
        %3028 = vset.pattern.permute.xlu0 0
        %3029 = vperm.xlu0 %3028, %v1830
        %v3030 = vpop.permute.xlu0 %3029
        %3031 = vset.pattern.permute.xlu0 0
        %3032 = vperm.xlu0 %3031, %v1879
        %v3033 = vpop.permute.xlu0 %3032
        %3034 = vset.pattern.permute.xlu0 0
        %3035 = vperm.xlu0 %3034, %v1928
        %v3036 = vpop.permute.xlu0 %3035
        %3037 = vset.pattern.permute.xlu0 0
        %3038 = vperm.xlu0 %3037, %v1977
        %v3039 = vpop.permute.xlu0 %3038
        %3040 = vset.pattern.permute.xlu0 0
        %3041 = vperm.xlu0 %3040, %v2026
        %v3042 = vpop.permute.xlu0 %3041
        %3043 = vset.pattern.permute.xlu0 0
        %3044 = vperm.xlu0 %3043, %v2075
        %v3045 = vpop.permute.xlu0 %3044
        %3046 = vset.pattern.permute.xlu0 0
        %3047 = vperm.xlu0 %3046, %v2124
        %v3048 = vpop.permute.xlu0 %3047
        %3049 = vset.pattern.permute.xlu0 0
        %3050 = vperm.xlu0 %3049, %v2173
        %v3051 = vpop.permute.xlu0 %3050
        %3052 = vset.pattern.permute.xlu0 0
        %3053 = vperm.xlu0 %3052, %v2222
        %v3054 = vpop.permute.xlu0 %3053
        %3055 = vset.pattern.permute.xlu0 0
        %3056 = vperm.xlu0 %3055, %v2271
        %v3057 = vpop.permute.xlu0 %3056
        %3058 = vset.pattern.permute.xlu0 0
        %3059 = vperm.xlu0 %3058, %v2320
        %v3060 = vpop.permute.xlu0 %3059
        %3061 = vset.pattern.permute.xlu0 0
        %3062 = vperm.xlu0 %3061, %v2369
        %v3063 = vpop.permute.xlu0 %3062
        %3064 = vset.pattern.permute.xlu0 0
        %3065 = vperm.xlu0 %3064, %v2418
        %v3066 = vpop.permute.xlu0 %3065
        %3067 = vset.pattern.permute.xlu0 0
        %3068 = vperm.xlu0 %3067, %v2467
        %v3069 = vpop.permute.xlu0 %3068
        %3070 = vset.pattern.permute.xlu0 0
        %3071 = vperm.xlu0 %3070, %v2516
        %v3072 = vpop.permute.xlu0 %3071
        %3073 = vset.pattern.permute.xlu0 0
        %3074 = vperm.xlu0 %3073, %v2565
        %v3075 = vpop.permute.xlu0 %3074
        %3076 = vset.pattern.permute.xlu0 0
        %3077 = vperm.xlu0 %3076, %v2614
        %v3078 = vpop.permute.xlu0 %3077
        %3079 = vset.pattern.permute.xlu0 0
        %3080 = vperm.xlu0 %3079, %v2663
        %v3081 = vpop.permute.xlu0 %3080
        %3082 = vset.pattern.permute.xlu0 0
        %3083 = vperm.xlu0 %3082, %v2712
        %v3084 = vpop.permute.xlu0 %3083
        %3085 = vset.pattern.permute.xlu0 0
        %3086 = vperm.xlu0 %3085, %v2761
        %v3087 = vpop.permute.xlu0 %3086
        %3088 = vset.pattern.permute.xlu0 0
        %3089 = vperm.xlu0 %3088, %v2810
        %v3090 = vpop.permute.xlu0 %3089
        %3091 = vset.pattern.permute.xlu0 0
        %3092 = vperm.xlu0 %3091, %v2859
        %v3093 = vpop.permute.xlu0 %3092
        %3094 = vset.pattern.permute.xlu0 0
        %3095 = vperm.xlu0 %3094, %v2908
        %v3096 = vpop.permute.xlu0 %3095
        %3097 = vset.pattern.permute.xlu0 0
        %3098 = vperm.xlu0 %3097, %v2957
        %v3099 = vpop.permute.xlu0 %3098
        %3100 = vset.pattern.permute.xlu0 0
        %3101 = vperm.xlu0 %3100, %v3006
        %v3102 = vpop.permute.xlu0 %3101
        %v3103 = vlaneseq
        %v3104 = vand.u32 %v3103, 127
        %v3105 = vlaneseq
        %v3106 = vshrl.u32 %v3105, 7
        %v3107 = vsub.s32 %v3104, %v3106
        %v3108 = vrot.slane %v3009, %v3107
        %v3109 = vadd.s32 %v3104, 4294967288
        %v3110 = vlaneseq
        %v3111 = vshrl.u32 %v3110, 7
        %v3112 = vsub.s32 %v3109, %v3111
        %v3113 = vrot.slane %v3012, %v3112
        %vm3114 = vcmask 130112
        %v3115 = vsel %vm3114, %v3113, %v3108
        %v3116 = vadd.s32 %v3104, 4294967280
        %v3117 = vlaneseq
        %v3118 = vshrl.u32 %v3117, 7
        %v3119 = vsub.s32 %v3116, %v3118
        %v3120 = vrot.slane %v3015, %v3119
        %vm3121 = vcmask 195712
        %v3122 = vsel %vm3121, %v3120, %v3115
        %v3123 = vadd.s32 %v3104, 4294967272
        %v3124 = vlaneseq
        %v3125 = vshrl.u32 %v3124, 7
        %v3126 = vsub.s32 %v3123, %v3125
        %v3127 = vrot.slane %v3018, %v3126
        %vm3128 = vcmask 261312
        %v3129 = vsel %vm3128, %v3127, %v3122
        %v3130 = vadd.s32 %v3104, 4294967264
        %v3131 = vlaneseq
        %v3132 = vshrl.u32 %v3131, 7
        %v3133 = vsub.s32 %v3130, %v3132
        %v3134 = vrot.slane %v3021, %v3133
        %vm3135 = vcmask 326912
        %v3136 = vsel %vm3135, %v3134, %v3129
        %v3137 = vadd.s32 %v3104, 4294967256
        %v3138 = vlaneseq
        %v3139 = vshrl.u32 %v3138, 7
        %v3140 = vsub.s32 %v3137, %v3139
        %v3141 = vrot.slane %v3024, %v3140
        %vm3142 = vcmask 392512
        %v3143 = vsel %vm3142, %v3141, %v3136
        %v3144 = vadd.s32 %v3104, 4294967248
        %v3145 = vlaneseq
        %v3146 = vshrl.u32 %v3145, 7
        %v3147 = vsub.s32 %v3144, %v3146
        %v3148 = vrot.slane %v3027, %v3147
        %vm3149 = vcmask 458112
        %v3150 = vsel %vm3149, %v3148, %v3143
        %v3151 = vadd.s32 %v3104, 4294967240
        %v3152 = vlaneseq
        %v3153 = vshrl.u32 %v3152, 7
        %v3154 = vsub.s32 %v3151, %v3153
        %v3155 = vrot.slane %v3030, %v3154
        %vm3156 = vcmask 523712
        %v3157 = vsel %vm3156, %v3155, %v3150
        %v3158 = vadd.s32 %v3104, 4294967232
        %v3159 = vlaneseq
        %v3160 = vshrl.u32 %v3159, 7
        %v3161 = vsub.s32 %v3158, %v3160
        %v3162 = vrot.slane %v3033, %v3161
        %vm3163 = vcmask 589312
        %v3164 = vsel %vm3163, %v3162, %v3157
        %v3165 = vadd.s32 %v3104, 4294967224
        %v3166 = vlaneseq
        %v3167 = vshrl.u32 %v3166, 7
        %v3168 = vsub.s32 %v3165, %v3167
        %v3169 = vrot.slane %v3036, %v3168
        %vm3170 = vcmask 654912
        %v3171 = vsel %vm3170, %v3169, %v3164
        %v3172 = vadd.s32 %v3104, 4294967216
        %v3173 = vlaneseq
        %v3174 = vshrl.u32 %v3173, 7
        %v3175 = vsub.s32 %v3172, %v3174
        %v3176 = vrot.slane %v3039, %v3175
        %vm3177 = vcmask 720512
        %v3178 = vsel %vm3177, %v3176, %v3171
        %v3179 = vadd.s32 %v3104, 4294967208
        %v3180 = vlaneseq
        %v3181 = vshrl.u32 %v3180, 7
        %v3182 = vsub.s32 %v3179, %v3181
        %v3183 = vrot.slane %v3042, %v3182
        %vm3184 = vcmask 786112
        %v3185 = vsel %vm3184, %v3183, %v3178
        %v3186 = vadd.s32 %v3104, 4294967200
        %v3187 = vlaneseq
        %v3188 = vshrl.u32 %v3187, 7
        %v3189 = vsub.s32 %v3186, %v3188
        %v3190 = vrot.slane %v3045, %v3189
        %vm3191 = vcmask 851712
        %v3192 = vsel %vm3191, %v3190, %v3185
        %v3193 = vadd.s32 %v3104, 4294967192
        %v3194 = vlaneseq
        %v3195 = vshrl.u32 %v3194, 7
        %v3196 = vsub.s32 %v3193, %v3195
        %v3197 = vrot.slane %v3048, %v3196
        %vm3198 = vcmask 917312
        %v3199 = vsel %vm3198, %v3197, %v3192
        %v3200 = vadd.s32 %v3104, 4294967184
        %v3201 = vlaneseq
        %v3202 = vshrl.u32 %v3201, 7
        %v3203 = vsub.s32 %v3200, %v3202
        %v3204 = vrot.slane %v3051, %v3203
        %vm3205 = vcmask 982912
        %v3206 = vsel %vm3205, %v3204, %v3199
        %v3207 = vadd.s32 %v3104, 4294967176
        %v3208 = vlaneseq
        %v3209 = vshrl.u32 %v3208, 7
        %v3210 = vsub.s32 %v3207, %v3209
        %v3211 = vrot.slane %v3054, %v3210
        %vm3212 = vcmask 1048512
        %v3213 = vsel %vm3212, %v3211, %v3206
        %v3214 = vlaneseq
        %v3215 = vshrl.u32 %v3214, 7
        %v3216 = vsub.s32 %v3104, %v3215
        %v3217 = vrot.slane %v3057, %v3216
        %v3218 = vlaneseq
        %v3219 = vshrl.u32 %v3218, 7
        %v3220 = vsub.s32 %v3109, %v3219
        %v3221 = vrot.slane %v3060, %v3220
        %v3222 = vsel %vm3114, %v3221, %v3217
        %v3223 = vlaneseq
        %v3224 = vshrl.u32 %v3223, 7
        %v3225 = vsub.s32 %v3116, %v3224
        %v3226 = vrot.slane %v3063, %v3225
        %v3227 = vsel %vm3121, %v3226, %v3222
        %v3228 = vlaneseq
        %v3229 = vshrl.u32 %v3228, 7
        %v3230 = vsub.s32 %v3123, %v3229
        %v3231 = vrot.slane %v3066, %v3230
        %v3232 = vsel %vm3128, %v3231, %v3227
        %v3233 = vlaneseq
        %v3234 = vshrl.u32 %v3233, 7
        %v3235 = vsub.s32 %v3130, %v3234
        %v3236 = vrot.slane %v3069, %v3235
        %v3237 = vsel %vm3135, %v3236, %v3232
        %v3238 = vlaneseq
        %v3239 = vshrl.u32 %v3238, 7
        %v3240 = vsub.s32 %v3137, %v3239
        %v3241 = vrot.slane %v3072, %v3240
        %v3242 = vsel %vm3142, %v3241, %v3237
        %v3243 = vlaneseq
        %v3244 = vshrl.u32 %v3243, 7
        %v3245 = vsub.s32 %v3144, %v3244
        %v3246 = vrot.slane %v3075, %v3245
        %v3247 = vsel %vm3149, %v3246, %v3242
        %v3248 = vlaneseq
        %v3249 = vshrl.u32 %v3248, 7
        %v3250 = vsub.s32 %v3151, %v3249
        %v3251 = vrot.slane %v3078, %v3250
        %v3252 = vsel %vm3156, %v3251, %v3247
        %v3253 = vlaneseq
        %v3254 = vshrl.u32 %v3253, 7
        %v3255 = vsub.s32 %v3158, %v3254
        %v3256 = vrot.slane %v3081, %v3255
        %v3257 = vsel %vm3163, %v3256, %v3252
        %v3258 = vlaneseq
        %v3259 = vshrl.u32 %v3258, 7
        %v3260 = vsub.s32 %v3165, %v3259
        %v3261 = vrot.slane %v3084, %v3260
        %v3262 = vsel %vm3170, %v3261, %v3257
        %v3263 = vlaneseq
        %v3264 = vshrl.u32 %v3263, 7
        %v3265 = vsub.s32 %v3172, %v3264
        %v3266 = vrot.slane %v3087, %v3265
        %v3267 = vsel %vm3177, %v3266, %v3262
        %v3268 = vlaneseq
        %v3269 = vshrl.u32 %v3268, 7
        %v3270 = vsub.s32 %v3179, %v3269
        %v3271 = vrot.slane %v3090, %v3270
        %v3272 = vsel %vm3184, %v3271, %v3267
        %v3273 = vlaneseq
        %v3274 = vshrl.u32 %v3273, 7
        %v3275 = vsub.s32 %v3186, %v3274
        %v3276 = vrot.slane %v3093, %v3275
        %v3277 = vsel %vm3191, %v3276, %v3272
        %v3278 = vlaneseq
        %v3279 = vshrl.u32 %v3278, 7
        %v3280 = vsub.s32 %v3193, %v3279
        %v3281 = vrot.slane %v3096, %v3280
        %v3282 = vsel %vm3198, %v3281, %v3277
        %v3283 = vlaneseq
        %v3284 = vshrl.u32 %v3283, 7
        %v3285 = vsub.s32 %v3200, %v3284
        %v3286 = vrot.slane %v3099, %v3285
        %v3287 = vsel %vm3205, %v3286, %v3282
        %v3288 = vlaneseq
        %v3289 = vshrl.u32 %v3288, 7
        %v3290 = vsub.s32 %v3207, %v3289
        %v3291 = vrot.slane %v3102, %v3290
        %v3292 = vsel %vm3212, %v3291, %v3287
        %v3293 = vcombine.low %v3213, %v3292
        %v3295 = vunpack.c.l.s4 1966171168
        %v3296 = vunpack.c.0.s8 %v3295
        %v3297 = vlaneseq
        %v3298 = vshrl.u32 %v3297, 7
        %v3299 = vsub.s32 %v3296, %v3298
        %v3300 = vrot.slane %v3293, %v3299
        %v3302 = vunpack.c.l.s4 1966171168
        %v3303 = vunpack.c.0.s8 %v3302
        %v3304 = vlaneseq
        %v3305 = vshrl.u32 %v3304, 7
        %v3306 = vsub.s32 %v3303, %v3305
        %v3307 = vrot.slane %v3300, %v3306
        %v3309 = vadd.f32 %v254, %v3307
        %v3310 = vlaneseq
        %vm3311 = vcmp.ge.s32.totalorder %v3310, 0
        %vm3312 = vcmp.lt.s32.totalorder %v3310, 256
        %vm3313 = vmand %vm3311, %vm3312
        %3314 = vst.msk [vmem:[#allocation2] sm:$0x3] %vm3313, %v3309
        // Predicated region
        $region45: #{main_model_forward.1} parent=39 // pred_check
          %p3315 = pneg %p245
        $region46: #{main_model_forward.1} parent=39 // pred_check_branch
          %3317 = sbr.rel (%p3315) target = $region48
        $region47: #{main_model_forward.1} parent=39 // pred_region
          %v3318 = vld [vmem:[#allocation2] sm:$0x3]
          %v3319 = vmul.f32 %v3318, 0.0078125
          %v3320 = vld [vmem:[%s1] sm:$0xff]
          %v3321 = vld [vmem:[%s1 + $0x8] sm:$0xff]
          %v3322 = vld [vmem:[%s1 + $0x10] sm:$0xff]
          %v3323 = vld [vmem:[%s1 + $0x18] sm:$0xff]
          %v3324 = vld [vmem:[%s1 + $0x20] sm:$0xff]
          %v3325 = vld [vmem:[%s1 + $0x28] sm:$0xff]
          %v3326 = vld [vmem:[%s1 + $0x30] sm:$0xff]
          %v3327 = vld [vmem:[%s1 + $0x38] sm:$0xff]
          %v3328 = vld [vmem:[%s1 + $0x40] sm:$0xff]
          %v3329 = vld [vmem:[%s1 + $0x48] sm:$0xff]
          %v3330 = vld [vmem:[%s1 + $0x50] sm:$0xff]
          %v3331 = vld [vmem:[%s1 + $0x58] sm:$0xff]
          %v3332 = vld [vmem:[%s1 + $0x60] sm:$0xff]
          %v3333 = vld [vmem:[%s1 + $0x68] sm:$0xff]
          %v3334 = vld [vmem:[%s1 + $0x70] sm:$0xff]
          %v3335 = vld [vmem:[%s1 + $0x78] sm:$0xff]
          %v3336 = vld [vmem:[%s1 + $0x80] sm:$0xff]
          %v3337 = vld [vmem:[%s1 + $0x88] sm:$0xff]
          %v3338 = vld [vmem:[%s1 + $0x90] sm:$0xff]
          %v3339 = vld [vmem:[%s1 + $0x98] sm:$0xff]
          %v3340 = vld [vmem:[%s1 + $0xa0] sm:$0xff]
          %v3341 = vld [vmem:[%s1 + $0xa8] sm:$0xff]
          %v3342 = vld [vmem:[%s1 + $0xb0] sm:$0xff]
          %v3343 = vld [vmem:[%s1 + $0xb8] sm:$0xff]
          %v3344 = vld [vmem:[%s1 + $0xc0] sm:$0xff]
          %v3345 = vld [vmem:[%s1 + $0xc8] sm:$0xff]
          %v3346 = vld [vmem:[%s1 + $0xd0] sm:$0xff]
          %v3347 = vld [vmem:[%s1 + $0xd8] sm:$0xff]
          %v3348 = vld [vmem:[%s1 + $0xe0] sm:$0xff]
          %v3349 = vld [vmem:[%s1 + $0xe8] sm:$0xff]
          %v3350 = vld [vmem:[%s1 + $0xf0] sm:$0xff]
          %v3351 = vld [vmem:[%s1 + $0xf8] sm:$0xff]
          %v3352 = vld [vmem:[%s2] sm:$0x1]
          %v3354 = vlaneseq
          %v3355 = vshrl.u32 %v3354, 7
          %v3356 = vsub.s32 0, %v3355
          %v3357 = vrot.slane %v3319, %v3356
          %v3358 = vlaneseq
          %v3359 = vshrl.u32 %v3358, 7
          %v3360 = vsub.s32 1, %v3359
          %v3361 = vrot.slane %v3319, %v3360
          %3364 = vmatprep.subr.mxu0 0.0
          %3365 = vmatpush1.msra.mxu0 %v3320
          %3366 = vmatprep.subr.mxu0 0.0
          %3367 = vmatpush1.msra.mxu0 %v3321
          %3368 = vmatprep.subr.mxu0 0.0
          %3369 = vmatpush1.msra.mxu0 %v3322
          %3370 = vmatprep.subr.mxu0 0.0
          %3371 = vmatpush1.msra.mxu0 %v3323
          %3372 = vmatprep.subr.mxu0 0.0
          %3373 = vmatpush1.msra.mxu0 %v3324
          %3374 = vmatprep.subr.mxu0 0.0
          %3375 = vmatpush1.msra.mxu0 %v3325
          %3376 = vmatprep.subr.mxu0 0.0
          %3377 = vmatpush1.msra.mxu0 %v3326
          %3378 = vmatprep.subr.mxu0 0.0
          %3379 = vmatpush1.msra.mxu0 %v3327
          %3380 = vmatprep.subr.mxu0 0.0
          %3381 = vmatpush1.msra.mxu0 %v3328
          %3382 = vmatprep.subr.mxu0 0.0
          %3383 = vmatpush1.msra.mxu0 %v3329
          %3384 = vmatprep.subr.mxu0 0.0
          %3385 = vmatpush1.msra.mxu0 %v3330
          %3386 = vmatprep.subr.mxu0 0.0
          %3387 = vmatpush1.msra.mxu0 %v3331
          %3388 = vmatprep.subr.mxu0 0.0
          %3389 = vmatpush1.msra.mxu0 %v3332
          %3390 = vmatprep.subr.mxu0 0.0
          %3391 = vmatpush1.msra.mxu0 %v3333
          %3392 = vmatprep.subr.mxu0 0.0
          %3393 = vmatpush1.msra.mxu0 %v3334
          %3394 = vmatprep.subr.mxu0 0.0
          %3395 = vmatpush1.msra.mxu0 %v3335
          %3396 = vmatprep.subr.mxu0 0.0
          %3397 = vmatpush1.msra.mxu0 %v3336
          %3398 = vmatprep.subr.mxu0 0.0
          %3399 = vmatpush1.msra.mxu0 %v3337
          %3400 = vmatprep.subr.mxu0 0.0
          %3401 = vmatpush1.msra.mxu0 %v3338
          %3402 = vmatprep.subr.mxu0 0.0
          %3403 = vmatpush1.msra.mxu0 %v3339
          %3404 = vmatprep.subr.mxu0 0.0
          %3405 = vmatpush1.msra.mxu0 %v3340
          %3406 = vmatprep.subr.mxu0 0.0
          %3407 = vmatpush1.msra.mxu0 %v3341
          %3408 = vmatprep.subr.mxu0 0.0
          %3409 = vmatpush1.msra.mxu0 %v3342
          %3410 = vmatprep.subr.mxu0 0.0
          %3411 = vmatpush1.msra.mxu0 %v3343
          %3412 = vmatprep.subr.mxu0 0.0
          %3413 = vmatpush1.msra.mxu0 %v3344
          %3414 = vmatprep.subr.mxu0 0.0
          %3415 = vmatpush1.msra.mxu0 %v3345
          %3416 = vmatprep.subr.mxu0 0.0
          %3417 = vmatpush1.msra.mxu0 %v3346
          %3418 = vmatprep.subr.mxu0 0.0
          %3419 = vmatpush1.msra.mxu0 %v3347
          %3420 = vmatprep.subr.mxu0 0.0
          %3421 = vmatpush1.msra.mxu0 %v3348
          %3422 = vmatprep.subr.mxu0 0.0
          %3423 = vmatpush1.msra.mxu0 %v3349
          %3424 = vmatprep.subr.mxu0 0.0
          %3425 = vmatpush1.msra.mxu0 %v3350
          %3426 = vmatprep.subr.mxu0 0.0
          %3427 = vmatpush1.msra.mxu0 %v3351
          %3428 = vmatprep.mubr.f32.mxu0 %v3361
          %3429 = vmatmul.mubr.f32.gmra.mrb[0].mxu0 %v3357
          %v3430 = vpop.f32.mrb[0].mxu0
          %v3431 = vadd.f32 %v3352, %v3430
          %v3432 = vpop.f32.mrb[0].mxu0
          %3433 = vdwg.mxu0
          %v3434 = vmax.f32 %v3431, 0.0
          %v3435 = vld [vmem:[%s3] sm:$0xff]
          %v3436 = vld [vmem:[%s3 + $0x8] sm:$0xff]
          %v3437 = vld [vmem:[%s3 + $0x10] sm:$0xff]
          %v3438 = vld [vmem:[%s3 + $0x18] sm:$0xff]
          %v3439 = vld [vmem:[%s3 + $0x20] sm:$0xff]
          %v3440 = vld [vmem:[%s3 + $0x28] sm:$0xff]
          %v3441 = vld [vmem:[%s3 + $0x30] sm:$0xff]
          %v3442 = vld [vmem:[%s3 + $0x38] sm:$0xff]
          %v3443 = vld [vmem:[%s3 + $0x40] sm:$0xff]
          %v3444 = vld [vmem:[%s3 + $0x48] sm:$0xff]
          %v3445 = vld [vmem:[%s3 + $0x50] sm:$0xff]
          %v3446 = vld [vmem:[%s3 + $0x58] sm:$0xff]
          %v3447 = vld [vmem:[%s3 + $0x60] sm:$0xff]
          %v3448 = vld [vmem:[%s3 + $0x68] sm:$0xff]
          %v3449 = vld [vmem:[%s3 + $0x70] sm:$0xff]
          %v3450 = vld [vmem:[%s3 + $0x78] sm:$0xff]
          %v3451 = vld [vmem:[%s4] sm:$0x1]
          %3452 = vmatprep.subr.mxu0 0.0
          %3453 = vmatpush1.msra.mxu0 %v3435
          %3454 = vmatprep.subr.mxu0 0.0
          %3455 = vmatpush1.msra.mxu0 %v3436
          %3456 = vmatprep.subr.mxu0 0.0
          %3457 = vmatpush1.msra.mxu0 %v3437
          %3458 = vmatprep.subr.mxu0 0.0
          %3459 = vmatpush1.msra.mxu0 %v3438
          %3460 = vmatprep.subr.mxu0 0.0
          %3461 = vmatpush1.msra.mxu0 %v3439
          %3462 = vmatprep.subr.mxu0 0.0
          %3463 = vmatpush1.msra.mxu0 %v3440
          %3464 = vmatprep.subr.mxu0 0.0
          %3465 = vmatpush1.msra.mxu0 %v3441
          %3466 = vmatprep.subr.mxu0 0.0
          %3467 = vmatpush1.msra.mxu0 %v3442
          %3468 = vmatprep.subr.mxu0 0.0
          %3469 = vmatpush1.msra.mxu0 %v3443
          %3470 = vmatprep.subr.mxu0 0.0
          %3471 = vmatpush1.msra.mxu0 %v3444
          %3472 = vmatprep.subr.mxu0 0.0
          %3473 = vmatpush1.msra.mxu0 %v3445
          %3474 = vmatprep.subr.mxu0 0.0
          %3475 = vmatpush1.msra.mxu0 %v3446
          %3476 = vmatprep.subr.mxu0 0.0
          %3477 = vmatpush1.msra.mxu0 %v3447
          %3478 = vmatprep.subr.mxu0 0.0
          %3479 = vmatpush1.msra.mxu0 %v3448
          %3480 = vmatprep.subr.mxu0 0.0
          %3481 = vmatpush1.msra.mxu0 %v3449
          %3482 = vmatprep.subr.mxu0 0.0
          %3483 = vmatpush1.msra.mxu0 %v3450
          %3484 = vmatprep.subr.mxu0 0.0
          %3485 = vmatpush1.msra.mxu0 0.0
          %3486 = vmatprep.subr.mxu0 0.0
          %3487 = vmatpush1.msra.mxu0 0.0
          %3488 = vmatprep.subr.mxu0 0.0
          %3489 = vmatpush1.msra.mxu0 0.0
          %3490 = vmatprep.subr.mxu0 0.0
          %3491 = vmatpush1.msra.mxu0 0.0
          %3492 = vmatprep.subr.mxu0 0.0
          %3493 = vmatpush1.msra.mxu0 0.0
          %3494 = vmatprep.subr.mxu0 0.0
          %3495 = vmatpush1.msra.mxu0 0.0
          %3496 = vmatprep.subr.mxu0 0.0
          %3497 = vmatpush1.msra.mxu0 0.0
          %3498 = vmatprep.subr.mxu0 0.0
          %3499 = vmatpush1.msra.mxu0 0.0
          %3500 = vmatprep.subr.mxu0 0.0
          %3501 = vmatpush1.msra.mxu0 0.0
          %3502 = vmatprep.subr.mxu0 0.0
          %3503 = vmatpush1.msra.mxu0 0.0
          %3504 = vmatprep.subr.mxu0 0.0
          %3505 = vmatpush1.msra.mxu0 0.0
          %3506 = vmatprep.subr.mxu0 0.0
          %3507 = vmatpush1.msra.mxu0 0.0
          %3508 = vmatprep.subr.mxu0 0.0
          %3509 = vmatpush1.msra.mxu0 0.0
          %3510 = vmatprep.subr.mxu0 0.0
          %3511 = vmatpush1.msra.mxu0 0.0
          %3512 = vmatprep.subr.mxu0 0.0
          %3513 = vmatpush1.msra.mxu0 0.0
          %3514 = vmatprep.subr.mxu0 0.0
          %3515 = vmatpush1.msra.mxu0 0.0
          %3516 = vmatprep.mubr.f32.mxu0 0.0
          %3517 = vmatmul.mubr.f32.gmra.mrb[0].mxu0 %v3434
          %v3518 = vpop.f32.mrb[0].mxu0
          %v3519 = vadd.f32 %v3451, %v3518
          %v3520 = vpop.f32.mrb[0].mxu0
          %3521 = vdwg.mxu0
          %v3522 = vmul.f32 %v3519, %v3519
          %vm3523 = vcmask 1040384
          %v3524 = vsel %vm3523, %v3522, 0.0
          %3525 = vadd.xlane.f32.xlu0 %v3524
          %v3526 = vpop.xlane.xlu0 %3525
          %v3527 = vmax.f32 %v3526, 1e-24
          %v3528 = vrsqrt.pop %v3527
          %v3529 = vmul.f32 %v3519, %v3528
          %3530 = vst [vmem:[%s236] sm:$0x1] %v3529
        $region48: #{main_model_forward.1} parent=39 // pred_fallthru
          _
        %s3531 = sand.u32 %s151, 1
        %s3532 = scalar_lea.sflag [#allocation4], %s3531
        %s3533 = sand.u32 %s151, 1
        %s3534 = scalar_lea.vmem [#allocation3], %s3533
        // Predicated region
        $region49: #{main_model_forward.1} parent=39 // pred_check
          %p3535 = pneg %p161
        $region50: #{main_model_forward.1} parent=39 // pred_check_branch
          %3537 = sbr.rel (%p3535) target = $region52
        $region51: #{main_model_forward.1} parent=39 // pred_region
          %s3539 = ssub.s32 16, 16
          %3540 = vsyncadd %s3532, %s3539
          %s3541 = smul.addr %s23, 16
          %s3542 = scalar_lea.hbm %s5, %s3541
          %s3544 = sshll.u32 %s3534, 4
          %s3545 = int_to_ptr.vmem [resolvable:$true] %s3544
          %3547 = dma.vmem_to_hbm [thread:$0]  %s3545, 16, %s3542, %s3532
        $region52: #{main_model_forward.1} parent=39 // pred_fallthru
          _
      $region40: #{main_model_forward.1} parent=5 // pred_fallthru
        _
      %p3548 = scmp.le.s32.totalorder 2, %s14
      // Predicated region
      $region53: #{main_model_forward.1} parent=5 // pred_check
        %p3549 = pneg %p3548
      $region54: #{main_model_forward.1} parent=5 // pred_check_branch
        %3551 = sbr.rel (%p3549) target = $region56
      $region55: #{main_model_forward.1} parent=5 // pred_region
        %s3552 = ssub.s32 %s14, 2
        // Predicated region
        $region57: #{main_model_forward.1} parent=55 // pred_check
          %p3553 = pneg %p167
        $region58: #{main_model_forward.1} parent=55 // pred_check_branch
          %3555 = sbr.rel (%p3553) target = $region60
        $region59: #{main_model_forward.1} parent=55 // pred_region
          %s3556 = sand.u32 %s152, 1
          %s3557 = scalar_lea.sflag [#allocation4], %s3556
          %s3558 = sand.u32 %s152, 1
          %s3559 = scalar_lea.vmem [#allocation3], %s3558
          %3560 = dma.done %s3557, 16
        $region60: #{main_model_forward.1} parent=55 // pred_fallthru
          _
      $region56: #{main_model_forward.1} parent=5 // pred_fallthru
        _
    $region6: #{main_model_forward.1} parent=1 // loop_footer
      %s18 = sadd.s32 1, %s14
    $region7: #{main_model_forward.1} parent=1 // loop_footer_branch
      %13 = sbr.rel target = $region3
    $region8: #{main_model_forward.1} parent=1 // loop_exit
      _
    %3561 = vsyncpa [#allocation4], 1
    %s3562 = scalar_lea.sflag [#allocation4], 1
    %3563 = vsyncpa %s3562, 1

</llo_original>
